<compile_context>
chip_gen: v7x
topology: tpu7x:2x2x1
jax: 0.10.0
libtpu: 0.0.40
codegen_flags: <defaults>
</compile_context>

<pallas_src>
import numpy as np

import jax
import jax.numpy as jnp
from jax.experimental import pallas as pl
from jax.experimental.pallas import tpu as pltpu


# ----------------------------- helpers ---------------------------------------------

def _round_up(v, m):
    return ((v + m - 1) // m) * m


def _pad2(arr, rows, cols):
    r, c = arr.shape
    return jnp.pad(arr, ((0, rows - r), (0, cols - c)))


# ----------------------- small-graph fully fused forward ---------------------------

def _fused_small_kernel(a_ref, x_ref, w1_ref, b1_ref, w2_ref, b2_ref,
                        w3_ref, b3_ref, p_ref, wl_ref, bl_ref, out_ref):
    """Whole GCN forward in one kernel; every operand VMEM-resident."""
    f32 = jnp.float32
    bf = a_ref.dtype
    a = a_ref[...]

    def conv(h, w_ref_, b_ref_, relu):
        hw = jnp.dot(h, w_ref_[...], preferred_element_type=f32).astype(bf)
        r = jnp.dot(a, hw, preferred_element_type=f32) + b_ref_[...]
        if relu:
            r = jnp.maximum(r, 0.0)
        return r.astype(bf)

    h = conv(x_ref[...], w1_ref, b1_ref, True)
    h = conv(h, w2_ref, b2_ref, True)
    h = conv(h, w3_ref, b3_ref, False)
    pooled = jnp.dot(p_ref[...], h, preferred_element_type=f32).astype(bf)
    # dropout(p=0.5, training=False) is identity in eval mode.
    out_ref[...] = jnp.dot(pooled, wl_ref[...], preferred_element_type=f32) + bl_ref[...]


def _gcn_forward_small(a_bf, x_bf, p_bf, weights_bf, biases_f32, g_pad, c_pad):
    w1, w2, w3, wl = weights_bf
    b1, b2, b3, bl = biases_f32
    inputs = (a_bf, x_bf, w1, b1, w2, b2, w3, b3, p_bf, wl, bl)

    n_pad, h_pad = a_bf.shape[0], w1.shape[1]
    flops = (2 * n_pad * x_bf.shape[1] * h_pad + 3 * 2 * n_pad * n_pad * h_pad
             + 2 * 2 * n_pad * h_pad * h_pad + 2 * g_pad * n_pad * h_pad
             + 2 * g_pad * h_pad * c_pad)
    in_bytes = sum(int(t.nbytes) for t in inputs)
    out_bytes = g_pad * c_pad * 4
    vmem_limit = int(min(56 << 20, max(16 << 20, 3 * (in_bytes + out_bytes))))

    vmem_spec = pl.BlockSpec(memory_space=pltpu.MemorySpace.VMEM)
    return pl.pallas_call(
        _fused_small_kernel,
        out_shape=jax.ShapeDtypeStruct((g_pad, c_pad), jnp.float32),
        in_specs=[vmem_spec] * len(inputs),
        out_specs=vmem_spec,
        compiler_params=pltpu.CompilerParams(vmem_limit_bytes=vmem_limit),
        cost_estimate=pl.CostEstimate(flops=flops, transcendentals=0,
                                      bytes_accessed=in_bytes + out_bytes),
    )(*inputs)


# ----------------------- general path: fused block-CSR GCN layer -------------------

def _make_fused_layer_kernel(apply_relu: bool, k_max: int, tk: int):
    """out_tile(i) = sum_k A[i, cols[i,k]] @ XW[cols[i,k]] + b  (ReLU optional).

    XW = X @ W is computed once into a VMEM scratch at grid step (0, 0) and
    re-used by every row tile; nonexistent (all-zero) A tiles are never
    fetched because the lhs index_map walks the block-CSR column table.
    """

    def kernel(cols_ref, nnz_ref, a_ref, x_ref, w_ref, b_ref, out_ref,
               xw_ref, acc_ref):
        i = pl.program_id(0)
        k = pl.program_id(1)

        @pl.when(jnp.logical_and(i == 0, k == 0))
        def _compute_xw():
            xw_ref[...] = jnp.dot(
                x_ref[...], w_ref[...],
                preferred_element_type=jnp.float32).astype(xw_ref.dtype)

        @pl.when(k == 0)
        def _init():
            acc_ref[...] = jnp.zeros_like(acc_ref)

        # Only real (nonzero) blocks of this row tile participate; padded grid
        # steps beyond nnz[i] re-point at the last valid block (no new DMA)
        # and are skipped here.
        @pl.when(k < nnz_ref[i])
        def _accumulate():
            col = cols_ref[i * k_max + k]
            start = pl.multiple_of(col * tk, tk)
            rhs = xw_ref[pl.ds(start, tk), :]
            acc_ref[...] += jnp.dot(a_ref[...], rhs,
                                    preferred_element_type=jnp.float32)

        @pl.when(k == k_max - 1)
        def _finalize():
            r = acc_ref[...] + b_ref[...]
            if apply_relu:
                r = jnp.maximum(r, 0.0)
            out_ref[...] = r.astype(out_ref.dtype)

    return kernel


def build_block_csr(a_pad, tm, tk):
    """Block-CSR structure of A_hat at (tm, tk) granularity (host side).

    Returns (cols_flat[int32, mb*k_max], nnz[int32, mb], k_max, nnz_total).
    Padding entries of each row repeat the last valid column index so the
    Pallas pipeline re-uses the resident block instead of issuing a new DMA.
    """
    a_np = np.asarray(jax.device_get(a_pad))
    n = a_np.shape[0]
    mb, kb = n // tm, n // tk
    blk = np.abs(a_np).reshape(mb, tm, kb, tk).sum(axis=(1, 3)) > 0.0
    nnz = blk.sum(axis=1).astype(np.int32)
    k_max = max(int(nnz.max()), 1)
    cols = np.zeros((mb, k_max), np.int32)
    for i in range(mb):
        idx = np.nonzero(blk[i])[0].astype(np.int32)
        if idx.size == 0:
            idx = np.zeros((1,), np.int32)
        pad = np.full((k_max - idx.size,), idx[-1], np.int32)
        cols[i] = np.concatenate([idx, pad])
    return (jnp.asarray(cols.reshape(-1)), jnp.asarray(nnz),
            k_max, int(blk.sum()))


def gcn_layer_fused(a_bf, cols, nnz, k_max, nnz_total, x_bf, w_bf, b_f32,
                    *, relu, tm=128, tk=128):
    """One GCN layer = A_hat @ (X @ W) + b (+ReLU) as a single pallas_call."""
    n_pad = a_bf.shape[0]
    f_pad = x_bf.shape[1]
    h_pad = w_bf.shape[1]
    assert n_pad % tm == 0 and n_pad % tk == 0
    mb = n_pad // tm
    KM = k_max

    flops = 2 * n_pad * f_pad * h_pad + 2 * nnz_total * tm * tk * h_pad
    bytes_accessed = (nnz_total * tm * tk * 2 + int(x_bf.nbytes)
                      + int(w_bf.nbytes) + int(b_f32.nbytes)
                      + n_pad * h_pad * 2)
    est_vmem = (2 * tm * tk * 2 + int(x_bf.nbytes) + int(w_bf.nbytes)
                + int(b_f32.nbytes) + n_pad * h_pad * 2 + tm * h_pad * 4
                + 2 * tm * h_pad * 2)
    vmem_limit = int(min(56 << 20, max(16 << 20, 3 * est_vmem)))

    return pl.pallas_call(
        _make_fused_layer_kernel(relu, k_max, tk),
        out_shape=jax.ShapeDtypeStruct((n_pad, h_pad), jnp.bfloat16),
        grid_spec=pltpu.PrefetchScalarGridSpec(
            num_scalar_prefetch=2,                 # cols table + nnz counts (SMEM)
            grid=(mb, k_max),                      # reduction axis last
            in_specs=[
                # A_hat tiles, block-CSR indexed: zero tiles never DMA'd.
                pl.BlockSpec((tm, tk),
                             lambda i, k, cols, nnz: (i, cols[i * KM + k])),
                # X and W: full arrays, constant index_map -> VMEM-resident.
                pl.BlockSpec((n_pad, f_pad), lambda i, k, cols, nnz: (0, 0)),
                pl.BlockSpec((f_pad, h_pad), lambda i, k, cols, nnz: (0, 0)),
                # bias (f32)
                pl.BlockSpec((1, h_pad), lambda i, k, cols, nnz: (0, 0)),
            ],
            out_specs=pl.BlockSpec((tm, h_pad), lambda i, k, cols, nnz: (i, 0)),
            scratch_shapes=[
                pltpu.VMEM((n_pad, h_pad), jnp.bfloat16),   # resident XW panel
                pltpu.VMEM((tm, h_pad), jnp.float32),       # f32 accumulator
            ],
        ),
        compiler_params=pltpu.CompilerParams(
            # i must stay "arbitrary": the XW scratch is written at (0,0).
            dimension_semantics=("arbitrary", "arbitrary"),
            vmem_limit_bytes=vmem_limit,
        ),
        cost_estimate=pl.CostEstimate(flops=flops, transcendentals=0,
                                      bytes_accessed=bytes_accessed),
    )(cols, nnz, a_bf, x_bf, w_bf, b_f32)


# ------------------------------- GCN forward (wrapper) -----------------------------

_A_TILE = 128           # finer A tiles maximize never-fetched empty blocks
_SMALL_PATH_BYTES = 8 << 20


def gcn_forward(a_hat, x, params, pool_mat, *, force_general=False):
    """Full GCN forward: 3x GCNConv (+ReLU on first two), mean-pool, Linear.

    Note: not wrapped in jax.jit at the top level because the block-CSR grid
    extent (max nnz per row tile) must be concrete; the pallas_calls are
    compiled individually and the residual glue is negligible.
    """
    w1, b1, w2, b2, w3, b3, wl, bl = params
    n_nodes, n_feat = x.shape
    hidden = w1.shape[1]
    n_classes = wl.shape[1]
    n_graphs = pool_mat.shape[0]

    # Lane-dense padding: feature/hidden/class dims -> multiples of 128, node
    # rows -> 128, graph rows -> 16 (bf16 sublane packing). Zero padding is
    # exact for every matmul here (padded A columns / pool columns are zero).
    n_pad = _round_up(n_nodes, 128)
    f_pad = _round_up(n_feat, 128)
    h_pad = _round_up(hidden, 128)
    c_pad = _round_up(n_classes, 128)
    g_pad = _round_up(n_graphs, 16)

    bf16 = jnp.bfloat16
    a_p = _pad2(a_hat, n_pad, n_pad)                  # f32 for CSR structure build
    a_bf = a_p.astype(bf16)
    x_p = _pad2(x, n_pad, f_pad).astype(bf16)
    p_p = _pad2(pool_mat, g_pad, n_pad).astype(bf16)

    w1_p = _pad2(w1, f_pad, h_pad).astype(bf16)
    w2_p = _pad2(w2, h_pad, h_pad).astype(bf16)
    w3_p = _pad2(w3, h_pad, h_pad).astype(bf16)
    wl_p = _pad2(wl, h_pad, c_pad).astype(bf16)
    b1_p = _pad2(b1, 1, h_pad).astype(jnp.float32)
    b2_p = _pad2(b2, 1, h_pad).astype(jnp.float32)
    b3_p = _pad2(b3, 1, h_pad).astype(jnp.float32)
    bl_p = _pad2(bl, 1, c_pad).astype(jnp.float32)

    total_bytes = sum(int(t.nbytes) for t in
                      (a_bf, x_p, p_p, w1_p, w2_p, w3_p, wl_p,
                       b1_p, b2_p, b3_p, bl_p))

    if not force_general and total_bytes <= _SMALL_PATH_BYTES:
        # Everything fits in VMEM: one kernel launch for the whole forward.
        out = _gcn_forward_small(a_bf, x_p, p_p,
                                 (w1_p, w2_p, w3_p, wl_p),
                                 (b1_p, b2_p, b3_p, bl_p), g_pad, c_pad)
        return out[:n_graphs, :n_classes]

    # General path: block-CSR structure of A_hat (shared, explicit tile sizes).
    cols, nnz, k_max, nnz_total = build_block_csr(a_p, _A_TILE, _A_TILE)

    def layer(h, w, b, relu):
        return gcn_layer_fused(a_bf, cols, nnz, k_max, nnz_total, h, w, b,
                               relu=relu, tm=_A_TILE, tk=_A_TILE)

    h = layer(x_p, w1_p, b1_p, relu=True)
    h = layer(h, w2_p, b2_p, relu=True)
    h = layer(h, w3_p, b3_p, relu=False)

    # Pool + final Linear are tiny (g_pad x h_pad); plain XLA beats sub-tile
    # Pallas launches here (review item 5).
    pooled = jnp.dot(p_p, h, preferred_element_type=jnp.float32).astype(bf16)
    # dropout(p=0.5, training=False) is identity in eval mode.
    # TODO(synk): add stochastic dropout via pltpu.prng_random_bits if a
    # training-mode forward is ever needed.
    out = jnp.dot(pooled, wl_p, preferred_element_type=jnp.float32) + bl_p
    return out[:n_graphs, :n_classes]


# ----------------------- plain-JAX glue (graph preprocessing) -----------------------

def build_normalized_adjacency(edge_index, num_nodes):
    """A_hat = D^{-1/2} (A + I) D^{-1/2}, dense float32 [N, N].

    TODO(synk): for large graphs build the block-CSR structure directly from
    edge_index instead of materializing the dense O(N^2) A_hat.
    """
    src, dst = edge_index
    a = jnp.zeros((num_nodes, num_nodes), jnp.float32)
    a = a.at[dst, src].set(1.0)          # message src -> dst lands in row dst
    a = a + jnp.eye(num_nodes, dtype=jnp.float32)
    deg = a.sum(axis=1)
    d_inv_sqrt = 1.0 / jnp.sqrt(deg)
    return d_inv_sqrt[:, None] * a * d_inv_sqrt[None, :]


def build_pool_matrix(batch, num_graphs):
    """P[g, n] = 1/|{n' : batch[n'] == g}| if batch[n] == g else 0."""
    one_hot = (batch[None, :] == jnp.arange(num_graphs)[:, None]).astype(jnp.float32)
    counts = jnp.maximum(one_hot.sum(axis=1, keepdims=True), 1.0)
    return one_hot / counts


def glorot(key, shape):
    fan_in, fan_out = shape
    limit = jnp.sqrt(6.0 / (fan_in + fan_out))
    return jax.random.uniform(key, shape, jnp.float32, -limit, limit)


if __name__ == "__main__":
    # Small synthetic problem consistent with the module's forward:
    #   num_node_features = 8, hidden_channels = 32, num_classes = 4
    #   N = 16 nodes forming 2 graphs of 8 nodes each (batched in one call).
    num_nodes = 16
    num_features = 8
    hidden = 32
    num_classes = 4
    num_graphs = 2

    key = jax.random.PRNGKey(0)
    kx, k1, k2, k3, kl = jax.random.split(key, 5)

    # Node features.
    x = jax.random.normal(kx, (num_nodes, num_features), jnp.float32)

    # Deterministic undirected edges: a ring within each graph of 8 nodes.
    src_list, dst_list = [], []
    for g in range(num_graphs):
        base = g * 8
        for i in range(8):
            a_n, b_n = base + i, base + (i + 1) % 8
            src_list += [a_n, b_n]
            dst_list += [b_n, a_n]
    edge_index = jnp.array([src_list, dst_list], dtype=jnp.int32)

    # Graph assignment vector (global_mean_pool's `batch`).
    batch = jnp.array([0] * 8 + [1] * 8, dtype=jnp.int32)

    # Deterministic parameter init (shapes from the module's __init__).
    w1 = glorot(k1, (num_features, hidden)); b1 = jnp.zeros((1, hidden), jnp.float32)
    w2 = glorot(k2, (hidden, hidden));       b2 = jnp.zeros((1, hidden), jnp.float32)
    w3 = glorot(k3, (hidden, hidden));       b3 = jnp.zeros((1, hidden), jnp.float32)
    wl = glorot(kl, (hidden, num_classes));  bl = jnp.zeros((1, num_classes), jnp.float32)
    params = (w1, b1, w2, b2, w3, b3, wl, bl)

    a_hat = build_normalized_adjacency(edge_index, num_nodes)
    pool_mat = build_pool_matrix(batch, num_graphs)

    # Path 1: small-graph fully fused single-kernel forward (auto-selected here).
    out_small = jax.block_until_ready(gcn_forward(a_hat, x, params, pool_mat))
    # Path 2: general block-CSR fused-layer path (forced, to exercise it too).
    out_general = jax.block_until_ready(
        gcn_forward(a_hat, x, params, pool_mat, force_general=True))

    # Reference 1: exact mirror of the kernels' bf16-in / f32-accumulate casts.
    def ref_forward_bf16():
        bf = jnp.bfloat16

        def mm(lhs, rhs):
            return jnp.dot(lhs.astype(bf), rhs.astype(bf),
                           preferred_element_type=jnp.float32)

        h = mm(x, w1).astype(bf)
        h = jnp.maximum(mm(a_hat, h) + b1, 0.0).astype(bf)
        h = mm(h, w2).astype(bf)
        h = jnp.maximum(mm(a_hat, h) + b2, 0.0).astype(bf)
        h = mm(h, w3).astype(bf)
        h = (mm(a_hat, h) + b3).astype(bf)
        pooled = mm(pool_mat, h).astype(bf)
        return mm(pooled, wl) + bl

    # Reference 2: pure f32 semantics of the original module.
    def ref_forward_f32():
        h = jnp.maximum(a_hat @ (x @ w1) + b1, 0.0)
        h = jnp.maximum(a_hat @ (h @ w2) + b2, 0.0)
        h = a_hat @ (h @ w3) + b3
        pooled = pool_mat @ h
        return pooled @ wl + bl

    ref16 = ref_forward_bf16()
    ref32 = ref_forward_f32()

    for out in (out_small, out_general):
        assert out.shape == (num_graphs, num_classes)
        assert jnp.allclose(out, ref16, atol=2e-3, rtol=2e-3), \
            float(jnp.max(jnp.abs(out - ref16)))
        assert jnp.allclose(out, ref32, atol=5e-2, rtol=5e-2), \
            float(jnp.max(jnp.abs(out - ref32)))

    print("KERNEL_OK")
</pallas_src>

<mosaic_0001>
module attributes {stable_mosaic.version = 11 : i64} {
  func.func @_fused_small_kernel(%arg0: memref<128x128xbf16, #tpu.memory_space<vmem>>, %arg1: memref<128x128xbf16, #tpu.memory_space<vmem>>, %arg2: memref<128x128xbf16, #tpu.memory_space<vmem>>, %arg3: memref<1x128xf32, #tpu.memory_space<vmem>>, %arg4: memref<128x128xbf16, #tpu.memory_space<vmem>>, %arg5: memref<1x128xf32, #tpu.memory_space<vmem>>, %arg6: memref<128x128xbf16, #tpu.memory_space<vmem>>, %arg7: memref<1x128xf32, #tpu.memory_space<vmem>>, %arg8: memref<16x128xbf16, #tpu.memory_space<vmem>>, %arg9: memref<128x128xbf16, #tpu.memory_space<vmem>>, %arg10: memref<1x128xf32, #tpu.memory_space<vmem>>, %arg11: memref<16x128xf32, #tpu.memory_space<vmem>>) attributes {dimension_semantics = [], scalar_prefetch = 0 : i64, scratch_operands = 0 : i64, tpu.core_type = #tpu.core_type<tc>} {
    %c0 = arith.constant 0 : index
    %c0_0 = arith.constant 0 : index
    %0 = vector.load %arg0[%c0, %c0_0] : memref<128x128xbf16, #tpu.memory_space<vmem>>, vector<128x128xbf16>
    %c0_1 = arith.constant 0 : index
    %c0_2 = arith.constant 0 : index
    %1 = vector.load %arg1[%c0_1, %c0_2] : memref<128x128xbf16, #tpu.memory_space<vmem>>, vector<128x128xbf16>
    %c0_3 = arith.constant 0 : index
    %c0_4 = arith.constant 0 : index
    %2 = vector.load %arg2[%c0_3, %c0_4] : memref<128x128xbf16, #tpu.memory_space<vmem>>, vector<128x128xbf16>
    %cst = arith.constant dense<0.000000e+00> : vector<128x128xf32>
    %3 = tpu.matmul %1, %2, %cst {dimension_numbers = #tpu.dot_dimension_numbers<[1], [0], [0], [1], [0, 0, 1, 1], [], []>} : vector<128x128xbf16>, vector<128x128xbf16>, vector<128x128xf32> -> vector<128x128xf32>
    %4 = arith.truncf %3 : vector<128x128xf32> to vector<128x128xbf16>
    %cst_5 = arith.constant dense<0.000000e+00> : vector<128x128xf32>
    %5 = tpu.matmul %0, %4, %cst_5 {dimension_numbers = #tpu.dot_dimension_numbers<[1], [0], [0], [1], [0, 0, 1, 1], [], []>} : vector<128x128xbf16>, vector<128x128xbf16>, vector<128x128xf32> -> vector<128x128xf32>
    %c0_6 = arith.constant 0 : index
    %c0_7 = arith.constant 0 : index
    %6 = vector.load %arg3[%c0_6, %c0_7] : memref<1x128xf32, #tpu.memory_space<vmem>>, vector<1x128xf32>
    %7 = vector.broadcast %6 : vector<1x128xf32> to vector<128x128xf32>
    %8 = arith.addf %5, %7 : vector<128x128xf32>
    %cst_8 = arith.constant 0.000000e+00 : f32
    %9 = vector.broadcast %cst_8 : f32 to vector<128x128xf32>
    %10 = arith.maximumf %8, %9 : vector<128x128xf32>
    %11 = arith.truncf %10 : vector<128x128xf32> to vector<128x128xbf16>
    %c0_9 = arith.constant 0 : index
    %c0_10 = arith.constant 0 : index
    %12 = vector.load %arg4[%c0_9, %c0_10] : memref<128x128xbf16, #tpu.memory_space<vmem>>, vector<128x128xbf16>
    %cst_11 = arith.constant dense<0.000000e+00> : vector<128x128xf32>
    %13 = tpu.matmul %11, %12, %cst_11 {dimension_numbers = #tpu.dot_dimension_numbers<[1], [0], [0], [1], [0, 0, 1, 1], [], []>} : vector<128x128xbf16>, vector<128x128xbf16>, vector<128x128xf32> -> vector<128x128xf32>
    %14 = arith.truncf %13 : vector<128x128xf32> to vector<128x128xbf16>
    %cst_12 = arith.constant dense<0.000000e+00> : vector<128x128xf32>
    %15 = tpu.matmul %0, %14, %cst_12 {dimension_numbers = #tpu.dot_dimension_numbers<[1], [0], [0], [1], [0, 0, 1, 1], [], []>} : vector<128x128xbf16>, vector<128x128xbf16>, vector<128x128xf32> -> vector<128x128xf32>
    %c0_13 = arith.constant 0 : index
    %c0_14 = arith.constant 0 : index
    %16 = vector.load %arg5[%c0_13, %c0_14] : memref<1x128xf32, #tpu.memory_space<vmem>>, vector<1x128xf32>
    %17 = vector.broadcast %16 : vector<1x128xf32> to vector<128x128xf32>
    %18 = arith.addf %15, %17 : vector<128x128xf32>
    %cst_15 = arith.constant 0.000000e+00 : f32
    %19 = vector.broadcast %cst_15 : f32 to vector<128x128xf32>
    %20 = arith.maximumf %18, %19 : vector<128x128xf32>
    %21 = arith.truncf %20 : vector<128x128xf32> to vector<128x128xbf16>
    %c0_16 = arith.constant 0 : index
    %c0_17 = arith.constant 0 : index
    %22 = vector.load %arg6[%c0_16, %c0_17] : memref<128x128xbf16, #tpu.memory_space<vmem>>, vector<128x128xbf16>
    %cst_18 = arith.constant dense<0.000000e+00> : vector<128x128xf32>
    %23 = tpu.matmul %21, %22, %cst_18 {dimension_numbers = #tpu.dot_dimension_numbers<[1], [0], [0], [1], [0, 0, 1, 1], [], []>} : vector<128x128xbf16>, vector<128x128xbf16>, vector<128x128xf32> -> vector<128x128xf32>
    %24 = arith.truncf %23 : vector<128x128xf32> to vector<128x128xbf16>
    %cst_19 = arith.constant dense<0.000000e+00> : vector<128x128xf32>
    %25 = tpu.matmul %0, %24, %cst_19 {dimension_numbers = #tpu.dot_dimension_numbers<[1], [0], [0], [1], [0, 0, 1, 1], [], []>} : vector<128x128xbf16>, vector<128x128xbf16>, vector<128x128xf32> -> vector<128x128xf32>
    %c0_20 = arith.constant 0 : index
    %c0_21 = arith.constant 0 : index
    %26 = vector.load %arg7[%c0_20, %c0_21] : memref<1x128xf32, #tpu.memory_space<vmem>>, vector<1x128xf32>
    %27 = vector.broadcast %26 : vector<1x128xf32> to vector<128x128xf32>
    %28 = arith.addf %25, %27 : vector<128x128xf32>
    %29 = arith.truncf %28 : vector<128x128xf32> to vector<128x128xbf16>
    %c0_22 = arith.constant 0 : index
    %c0_23 = arith.constant 0 : index
    %30 = vector.load %arg8[%c0_22, %c0_23] : memref<16x128xbf16, #tpu.memory_space<vmem>>, vector<16x128xbf16>
    %cst_24 = arith.constant dense<0.000000e+00> : vector<16x128xf32>
    %31 = tpu.matmul %30, %29, %cst_24 {dimension_numbers = #tpu.dot_dimension_numbers<[1], [0], [0], [1], [0, 0, 1, 1], [], []>} : vector<16x128xbf16>, vector<128x128xbf16>, vector<16x128xf32> -> vector<16x128xf32>
    %32 = arith.truncf %31 : vector<16x128xf32> to vector<16x128xbf16>
    %c0_25 = arith.constant 0 : index
    %c0_26 = arith.constant 0 : index
    %33 = vector.load %arg9[%c0_25, %c0_26] : memref<128x128xbf16, #tpu.memory_space<vmem>>, vector<128x128xbf16>
    %cst_27 = arith.constant dense<0.000000e+00> : vector<16x128xf32>
    %34 = tpu.matmul %32, %33, %cst_27 {dimension_numbers = #tpu.dot_dimension_numbers<[1], [0], [0], [1], [0, 0, 1, 1], [], []>} : vector<16x128xbf16>, vector<128x128xbf16>, vector<16x128xf32> -> vector<16x128xf32>
    %c0_28 = arith.constant 0 : index
    %c0_29 = arith.constant 0 : index
    %35 = vector.load %arg10[%c0_28, %c0_29] : memref<1x128xf32, #tpu.memory_space<vmem>>, vector<1x128xf32>
    %36 = vector.broadcast %35 : vector<1x128xf32> to vector<16x128xf32>
    %37 = arith.addf %34, %36 : vector<16x128xf32>
    %c0_30 = arith.constant 0 : index
    %c0_31 = arith.constant 0 : index
    %38 = vector.load %arg11[%c0_30, %c0_31] : memref<16x128xf32, #tpu.memory_space<vmem>>, vector<16x128xf32>
    tpu.vector_store %arg11[%c0_30, %c0_31], %37 {strides = array<i32>} : memref<16x128xf32, #tpu.memory_space<vmem>>, vector<16x128xf32>,
    return
  }
}

</mosaic_0001>

<llo_original>
// kernel: tpu_custom_call.1
$region0: #{tpu_custom_call.1}
  #allocation0 [shape = 'u32[]', space=smem, size = 0x4, offset = 0x4, fixed_abs, tag = 'smem constant byte address 0x4 - core index']
  #allocation1 [shape = 'u32[144,128]{1,0:T(1,128)}', space=vmem, size = 0x12000, scoped, tag = 'internal scratch']
  %s0 = inlined_call_operand.hbm [shape: bf16[128,128], index: 0, kind: input, shape index: {}]
  %s1 = inlined_call_operand.hbm [shape: bf16[128,128], index: 1, kind: input, shape index: {}]
  %s2 = inlined_call_operand.hbm [shape: bf16[128,128], index: 2, kind: input, shape index: {}]
  %s3 = inlined_call_operand.vmem [shape: f32[1,128], index: 3, kind: input, shape index: {}]
  %s4 = inlined_call_operand.hbm [shape: bf16[128,128], index: 4, kind: input, shape index: {}]
  %s5 = inlined_call_operand.vmem [shape: f32[1,128], index: 5, kind: input, shape index: {}]
  %s6 = inlined_call_operand.hbm [shape: bf16[128,128], index: 6, kind: input, shape index: {}]
  %s7 = inlined_call_operand.vmem [shape: f32[1,128], index: 7, kind: input, shape index: {}]
  %s8 = inlined_call_operand.vmem [shape: bf16[16,128], index: 8, kind: input, shape index: {}]
  %s9 = inlined_call_operand.hbm [shape: bf16[128,128], index: 9, kind: input, shape index: {}]
  %s10 = inlined_call_operand.vmem [shape: f32[1,128], index: 10, kind: input, shape index: {}]
  %s11 = inlined_call_operand.hbm [shape: f32[16,128], index: 11, kind: output, shape index: {}]
  %s12 = sld [smem:[#allocation0]]
  $region78: #{tpu_custom_call.1} parent=0
    _
  %s14 = ssub.s32 1, %s12
  %s15 = scalar_select 0, %s14, %s12
  $region1: #{tpu_custom_call.1} parent=0
    #allocation2 [shape = 'u8[32768]{0}', space=vmem, size = 0x8000, scoped, tag = 'input window, operand 0, single buffered']
    #allocation3 [shape = 's32[1]{0}', space=sflag, size = 0x4, scoped, tag = 'scoped memory for tpu_custom_call.1']
    #allocation4 [shape = 's32[1]{0}', space=sflag, size = 0x4, scoped, tag = 'scoped memory for tpu_custom_call.1']
    #allocation5 [shape = 'u8[32768]{0}', space=vmem, size = 0x8000, scoped, tag = 'input window, operand 1, single buffered']
    #allocation6 [shape = 's32[1]{0}', space=sflag, size = 0x4, scoped, tag = 'scoped memory for tpu_custom_call.1']
    #allocation7 [shape = 'u8[32768]{0}', space=vmem, size = 0x8000, scoped, tag = 'input window, operand 2, single buffered']
    #allocation8 [shape = 'u8[32768]{0}', space=vmem, size = 0x8000, scoped, tag = 'input window, operand 4, single buffered']
    #allocation9 [shape = 's32[1]{0}', space=sflag, size = 0x4, scoped, tag = 'scoped memory for tpu_custom_call.1']
    #allocation10 [shape = 'u8[32768]{0}', space=vmem, size = 0x8000, scoped, tag = 'input window, operand 6, single buffered']
    #allocation11 [shape = 'u8[32768]{0}', space=vmem, size = 0x8000, scoped, tag = 'input window, operand 9, single buffered']
    #allocation12 [shape = 's32[1]{0}', space=sflag, size = 0x4, scoped, tag = 'scoped memory for tpu_custom_call.1']
    #allocation13 [shape = 'u8[8192]{0}', space=vmem, size = 0x2000, scoped, tag = 'output window, operand 0, single buffered']
    %16 = vsyncpa [#allocation3], 0
    %17 = vsyncpa [#allocation6], 0
    %18 = vsyncpa [#allocation9], 0
    %19 = vsyncpa [#allocation12], 0
    %20 = vsyncpa [#allocation4], 0
    // Predicated region
    $region2: #{tpu_custom_call.1} parent=1 // pred_check
      _
    $region3: #{tpu_custom_call.1} parent=1 // pred_check_branch
      %22 = sbr.rel (0) target = $region5
    $region4: #{tpu_custom_call.1} parent=1 // pred_region
      %s24 = ssub.s32 1024, 1024
      %25 = vsyncadd [#allocation3], %s24
      %s26 = sshll.u32 [#allocation2], 4
      %s27 = int_to_ptr.vmem [resolvable:$true] %s26
      %32 = dma.hbm_to_vmem [thread:$0]  %s0, 1024, %s27, [#allocation3], 64, 64, 4
    $region5: #{tpu_custom_call.1} parent=1 // pred_fallthru
      _
    // Predicated region
    $region6: #{tpu_custom_call.1} parent=1 // pred_check
      _
    $region7: #{tpu_custom_call.1} parent=1 // pred_check_branch
      %34 = sbr.rel (0) target = $region9
    $region8: #{tpu_custom_call.1} parent=1 // pred_region
      %s36 = ssub.s32 1024, 1024
      %37 = vsyncadd [#allocation6], %s36
      %s38 = sshll.u32 [#allocation5], 4
      %s39 = int_to_ptr.vmem [resolvable:$true] %s38
      %44 = dma.hbm_to_vmem [thread:$0]  %s1, 1024, %s39, [#allocation6], 64, 64, 4
    $region9: #{tpu_custom_call.1} parent=1 // pred_fallthru
      _
    // Predicated region
    $region10: #{tpu_custom_call.1} parent=1 // pred_check
      _
    $region11: #{tpu_custom_call.1} parent=1 // pred_check_branch
      %46 = sbr.rel (0) target = $region13
    $region12: #{tpu_custom_call.1} parent=1 // pred_region
      %s48 = ssub.s32 1024, 1024
      %49 = vsyncadd [#allocation6], %s48
      %s50 = sshll.u32 [#allocation7], 4
      %s51 = int_to_ptr.vmem [resolvable:$true] %s50
      %56 = dma.hbm_to_vmem [thread:$0]  %s2, 1024, %s51, [#allocation6], 64, 64, 4
    $region13: #{tpu_custom_call.1} parent=1 // pred_fallthru
      _
    // Predicated region
    $region14: #{tpu_custom_call.1} parent=1 // pred_check
      _
    $region15: #{tpu_custom_call.1} parent=1 // pred_check_branch
      %58 = sbr.rel (0) target = $region17
    $region16: #{tpu_custom_call.1} parent=1 // pred_region
      _
    $region17: #{tpu_custom_call.1} parent=1 // pred_fallthru
      _
    // Predicated region
    $region18: #{tpu_custom_call.1} parent=1 // pred_check
      _
    $region19: #{tpu_custom_call.1} parent=1 // pred_check_branch
      %60 = sbr.rel (0) target = $region21
    $region20: #{tpu_custom_call.1} parent=1 // pred_region
      %s62 = ssub.s32 1024, 1024
      %63 = vsyncadd [#allocation9], %s62
      %s64 = sshll.u32 [#allocation8], 4
      %s65 = int_to_ptr.vmem [resolvable:$true] %s64
      %70 = dma.hbm_to_vmem [thread:$0]  %s4, 1024, %s65, [#allocation9], 64, 64, 4
    $region21: #{tpu_custom_call.1} parent=1 // pred_fallthru
      _
    // Predicated region
    $region22: #{tpu_custom_call.1} parent=1 // pred_check
      _
    $region23: #{tpu_custom_call.1} parent=1 // pred_check_branch
      %72 = sbr.rel (0) target = $region25
    $region24: #{tpu_custom_call.1} parent=1 // pred_region
      _
    $region25: #{tpu_custom_call.1} parent=1 // pred_fallthru
      _
    // Predicated region
    $region26: #{tpu_custom_call.1} parent=1 // pred_check
      _
    $region27: #{tpu_custom_call.1} parent=1 // pred_check_branch
      %74 = sbr.rel (0) target = $region29
    $region28: #{tpu_custom_call.1} parent=1 // pred_region
      %s76 = ssub.s32 1024, 1024
      %77 = vsyncadd [#allocation9], %s76
      %s78 = sshll.u32 [#allocation10], 4
      %s79 = int_to_ptr.vmem [resolvable:$true] %s78
      %84 = dma.hbm_to_vmem [thread:$0]  %s6, 1024, %s79, [#allocation9], 64, 64, 4
    $region29: #{tpu_custom_call.1} parent=1 // pred_fallthru
      _
    // Predicated region
    $region30: #{tpu_custom_call.1} parent=1 // pred_check
      _
    $region31: #{tpu_custom_call.1} parent=1 // pred_check_branch
      %86 = sbr.rel (0) target = $region33
    $region32: #{tpu_custom_call.1} parent=1 // pred_region
      _
    $region33: #{tpu_custom_call.1} parent=1 // pred_fallthru
      _
    // Predicated region
    $region34: #{tpu_custom_call.1} parent=1 // pred_check
      _
    $region35: #{tpu_custom_call.1} parent=1 // pred_check_branch
      %88 = sbr.rel (0) target = $region37
    $region36: #{tpu_custom_call.1} parent=1 // pred_region
      _
    $region37: #{tpu_custom_call.1} parent=1 // pred_fallthru
      _
    // Predicated region
    $region38: #{tpu_custom_call.1} parent=1 // pred_check
      _
    $region39: #{tpu_custom_call.1} parent=1 // pred_check_branch
      %90 = sbr.rel (0) target = $region41
    $region40: #{tpu_custom_call.1} parent=1 // pred_region
      %s92 = ssub.s32 1024, 1024
      %93 = vsyncadd [#allocation12], %s92
      %s94 = sshll.u32 [#allocation11], 4
      %s95 = int_to_ptr.vmem [resolvable:$true] %s94
      %100 = dma.hbm_to_vmem [thread:$0]  %s9, 1024, %s95, [#allocation12], 64, 64, 4
    $region41: #{tpu_custom_call.1} parent=1 // pred_fallthru
      _
    // Predicated region
    $region42: #{tpu_custom_call.1} parent=1 // pred_check
      _
    $region43: #{tpu_custom_call.1} parent=1 // pred_check_branch
      %102 = sbr.rel (0) target = $region45
    $region44: #{tpu_custom_call.1} parent=1 // pred_region
      _
    $region45: #{tpu_custom_call.1} parent=1 // pred_fallthru
      _
    // Predicated region
    $region46: #{tpu_custom_call.1} parent=1 // pred_check
      _
    $region47: #{tpu_custom_call.1} parent=1 // pred_check_branch
      %104 = sbr.rel (0) target = $region49
    $region48: #{tpu_custom_call.1} parent=1 // pred_region
      %105 = dma.done [#allocation3], 1024
    $region49: #{tpu_custom_call.1} parent=1 // pred_fallthru
      _
    // Predicated region
    $region50: #{tpu_custom_call.1} parent=1 // pred_check
      _
    $region51: #{tpu_custom_call.1} parent=1 // pred_check_branch
      %107 = sbr.rel (0) target = $region53
    $region52: #{tpu_custom_call.1} parent=1 // pred_region
      %108 = dma.done [#allocation6], 1024
    $region53: #{tpu_custom_call.1} parent=1 // pred_fallthru
      _
    // Predicated region
    $region54: #{tpu_custom_call.1} parent=1 // pred_check
      _
    $region55: #{tpu_custom_call.1} parent=1 // pred_check_branch
      %110 = sbr.rel (0) target = $region57
    $region56: #{tpu_custom_call.1} parent=1 // pred_region
      %111 = dma.done [#allocation6], 1024
    $region57: #{tpu_custom_call.1} parent=1 // pred_fallthru
      _
    // Predicated region
    $region58: #{tpu_custom_call.1} parent=1 // pred_check
      _
    $region59: #{tpu_custom_call.1} parent=1 // pred_check_branch
      %113 = sbr.rel (0) target = $region61
    $region60: #{tpu_custom_call.1} parent=1 // pred_region
      %114 = dma.done [#allocation9], 1024
    $region61: #{tpu_custom_call.1} parent=1 // pred_fallthru
      _
    // Predicated region
    $region62: #{tpu_custom_call.1} parent=1 // pred_check
      _
    $region63: #{tpu_custom_call.1} parent=1 // pred_check_branch
      %116 = sbr.rel (0) target = $region65
    $region64: #{tpu_custom_call.1} parent=1 // pred_region
      %117 = dma.done [#allocation9], 1024
    $region65: #{tpu_custom_call.1} parent=1 // pred_fallthru
      _
    // Predicated region
    $region66: #{tpu_custom_call.1} parent=1 // pred_check
      _
    $region67: #{tpu_custom_call.1} parent=1 // pred_check_branch
      %119 = sbr.rel (0) target = $region69
    $region68: #{tpu_custom_call.1} parent=1 // pred_region
      %120 = dma.done [#allocation12], 1024
    $region69: #{tpu_custom_call.1} parent=1 // pred_fallthru
      _
    %v122 = vld [vmem:[#allocation2] sm:$0xf]
    %v123 = vld [vmem:[#allocation2 + $0x4] sm:$0xf]
    %v124 = vld [vmem:[#allocation2 + $0x8] sm:$0xf]
    %v125 = vld [vmem:[#allocation2 + $0xc] sm:$0xf]
    %v126 = vld [vmem:[#allocation2 + $0x10] sm:$0xf]
    %v127 = vld [vmem:[#allocation2 + $0x14] sm:$0xf]
    %v128 = vld [vmem:[#allocation2 + $0x18] sm:$0xf]
    %v129 = vld [vmem:[#allocation2 + $0x1c] sm:$0xf]
    %v130 = vld [vmem:[#allocation2 + $0x20] sm:$0xf]
    %v131 = vld [vmem:[#allocation2 + $0x24] sm:$0xf]
    %v132 = vld [vmem:[#allocation2 + $0x28] sm:$0xf]
    %v133 = vld [vmem:[#allocation2 + $0x2c] sm:$0xf]
    %v134 = vld [vmem:[#allocation2 + $0x30] sm:$0xf]
    %v135 = vld [vmem:[#allocation2 + $0x34] sm:$0xf]
    %v136 = vld [vmem:[#allocation2 + $0x38] sm:$0xf]
    %v137 = vld [vmem:[#allocation2 + $0x3c] sm:$0xf]
    %v138 = vld [vmem:[#allocation5] sm:$0xf]
    %v139 = vld [vmem:[#allocation5 + $0x4] sm:$0xf]
    %v140 = vld [vmem:[#allocation5 + $0x8] sm:$0xf]
    %v141 = vld [vmem:[#allocation5 + $0xc] sm:$0xf]
    %v142 = vld [vmem:[#allocation5 + $0x10] sm:$0xf]
    %v143 = vld [vmem:[#allocation5 + $0x14] sm:$0xf]
    %v144 = vld [vmem:[#allocation5 + $0x18] sm:$0xf]
    %v145 = vld [vmem:[#allocation5 + $0x1c] sm:$0xf]
    %v146 = vld [vmem:[#allocation5 + $0x20] sm:$0xf]
    %v147 = vld [vmem:[#allocation5 + $0x24] sm:$0xf]
    %v148 = vld [vmem:[#allocation5 + $0x28] sm:$0xf]
    %v149 = vld [vmem:[#allocation5 + $0x2c] sm:$0xf]
    %v150 = vld [vmem:[#allocation5 + $0x30] sm:$0xf]
    %v151 = vld [vmem:[#allocation5 + $0x34] sm:$0xf]
    %v152 = vld [vmem:[#allocation5 + $0x38] sm:$0xf]
    %v153 = vld [vmem:[#allocation5 + $0x3c] sm:$0xf]
    %v154 = vld [vmem:[#allocation7] sm:$0xf]
    %v155 = vld [vmem:[#allocation7 + $0x4] sm:$0xf]
    %v156 = vld [vmem:[#allocation7 + $0x8] sm:$0xf]
    %v157 = vld [vmem:[#allocation7 + $0xc] sm:$0xf]
    %v158 = vld [vmem:[#allocation7 + $0x10] sm:$0xf]
    %v159 = vld [vmem:[#allocation7 + $0x14] sm:$0xf]
    %v160 = vld [vmem:[#allocation7 + $0x18] sm:$0xf]
    %v161 = vld [vmem:[#allocation7 + $0x1c] sm:$0xf]
    %v162 = vld [vmem:[#allocation7 + $0x20] sm:$0xf]
    %v163 = vld [vmem:[#allocation7 + $0x24] sm:$0xf]
    %v164 = vld [vmem:[#allocation7 + $0x28] sm:$0xf]
    %v165 = vld [vmem:[#allocation7 + $0x2c] sm:$0xf]
    %v166 = vld [vmem:[#allocation7 + $0x30] sm:$0xf]
    %v167 = vld [vmem:[#allocation7 + $0x34] sm:$0xf]
    %v168 = vld [vmem:[#allocation7 + $0x38] sm:$0xf]
    %v169 = vld [vmem:[#allocation7 + $0x3c] sm:$0xf]
    %v186 = vunpack.c.l.b16 %v138
    %v187 = vunpack.c.l.b16 %v139
    %v188 = vunpack.c.l.b16 %v140
    %v189 = vunpack.c.l.b16 %v141
    %v190 = vunpack.c.l.b16 %v142
    %v191 = vunpack.c.l.b16 %v143
    %v192 = vunpack.c.l.b16 %v144
    %v193 = vunpack.c.l.b16 %v145
    %v194 = vunpack.c.l.b16 %v146
    %v195 = vunpack.c.l.b16 %v147
    %v196 = vunpack.c.l.b16 %v148
    %v197 = vunpack.c.l.b16 %v149
    %v198 = vunpack.c.l.b16 %v150
    %v199 = vunpack.c.l.b16 %v151
    %v200 = vunpack.c.l.b16 %v152
    %v201 = vunpack.c.l.b16 %v153
    %v202 = vpack.c.b16 %v187, %v186
    %v203 = vpack.c.b16 %v189, %v188
    %v204 = vpack.c.b16 %v191, %v190
    %v205 = vpack.c.b16 %v193, %v192
    %v206 = vpack.c.b16 %v195, %v194
    %v207 = vpack.c.b16 %v197, %v196
    %v208 = vpack.c.b16 %v199, %v198
    %v209 = vpack.c.b16 %v201, %v200
    %v234 = vunpack.c.l.b16 %v154
    %v235 = vunpack.c.l.b16 %v155
    %v236 = vunpack.c.l.b16 %v156
    %v237 = vunpack.c.l.b16 %v157
    %v238 = vunpack.c.l.b16 %v158
    %v239 = vunpack.c.l.b16 %v159
    %v240 = vunpack.c.l.b16 %v160
    %v241 = vunpack.c.l.b16 %v161
    %v242 = vunpack.c.l.b16 %v162
    %v243 = vunpack.c.l.b16 %v163
    %v244 = vunpack.c.l.b16 %v164
    %v245 = vunpack.c.l.b16 %v165
    %v246 = vunpack.c.l.b16 %v166
    %v247 = vunpack.c.l.b16 %v167
    %v248 = vunpack.c.l.b16 %v168
    %v249 = vunpack.c.l.b16 %v169
    %v250 = vpack.c.b16 %v235, %v234
    %v251 = vpack.c.b16 %v237, %v236
    %v252 = vpack.c.b16 %v239, %v238
    %v253 = vpack.c.b16 %v241, %v240
    %v254 = vpack.c.b16 %v243, %v242
    %v255 = vpack.c.b16 %v245, %v244
    %v256 = vpack.c.b16 %v247, %v246
    %v257 = vpack.c.b16 %v249, %v248
    %266 = vmatprep.subr.bf16.mxu0 0
    %267 = vmatpush1.bf16.msra.mxu0 %v250
    %268 = vmatprep.subr.bf16.mxu0 0
    %269 = vmatpush1.bf16.msra.mxu0 %v251
    %270 = vmatprep.subr.bf16.mxu0 0
    %271 = vmatpush1.bf16.msra.mxu0 %v252
    %272 = vmatprep.subr.bf16.mxu0 0
    %273 = vmatpush1.bf16.msra.mxu0 %v253
    %274 = vmatprep.subr.bf16.mxu0 0
    %275 = vmatpush1.bf16.msra.mxu0 %v254
    %276 = vmatprep.subr.bf16.mxu0 0
    %277 = vmatpush1.bf16.msra.mxu0 %v255
    %278 = vmatprep.subr.bf16.mxu0 0
    %279 = vmatpush1.bf16.msra.mxu0 %v256
    %280 = vmatprep.subr.bf16.mxu0 0
    %281 = vmatpush1.bf16.msra.mxu0 %v257
    %282 = vmatprep.subr.bf16.mxu0 0
    %283 = vmatpush1.bf16.msra.mxu0 0
    %284 = vmatprep.subr.bf16.mxu0 0
    %285 = vmatpush1.bf16.msra.mxu0 0
    %286 = vmatprep.subr.bf16.mxu0 0
    %287 = vmatpush1.bf16.msra.mxu0 0
    %288 = vmatprep.subr.bf16.mxu0 0
    %289 = vmatpush1.bf16.msra.mxu0 0
    %290 = vmatprep.subr.bf16.mxu0 0
    %291 = vmatpush1.bf16.msra.mxu0 0
    %292 = vmatprep.subr.bf16.mxu0 0
    %293 = vmatpush1.bf16.msra.mxu0 0
    %294 = vmatprep.subr.bf16.mxu0 0
    %295 = vmatpush1.bf16.msra.mxu0 0
    %296 = vmatprep.subr.bf16.mxu0 0
    %297 = vmatpush1.bf16.msra.mxu0 0
    %298 = vmatprep.mubr.bf16.mxu0 0
    %299 = vmatmul.mubr.bf16.gmra.mrb[0].mxu0 %v202
    %v300 = vpop.f32.mrb[0].mxu0
    %v301 = vadd.f32 0.0, %v300
    %v302 = vpop.f32.mrb[0].mxu0
    %v303 = vpop.f32.mrb[0].mxu0
    %v304 = vadd.f32 0.0, %v303
    %v305 = vpop.f32.mrb[0].mxu0
    %306 = vmatprep.mubr.bf16.mxu0 0
    %307 = vmatmul.mubr.bf16.gmra.mrb[0].mxu0 %v203
    %v308 = vpop.f32.mrb[0].mxu0
    %v309 = vadd.f32 0.0, %v308
    %v310 = vpop.f32.mrb[0].mxu0
    %v311 = vpop.f32.mrb[0].mxu0
    %v312 = vadd.f32 0.0, %v311
    %v313 = vpop.f32.mrb[0].mxu0
    %314 = vmatprep.mubr.bf16.mxu0 0
    %315 = vmatmul.mubr.bf16.gmra.mrb[0].mxu0 %v204
    %v316 = vpop.f32.mrb[0].mxu0
    %v317 = vadd.f32 0.0, %v316
    %v318 = vpop.f32.mrb[0].mxu0
    %v319 = vpop.f32.mrb[0].mxu0
    %v320 = vadd.f32 0.0, %v319
    %v321 = vpop.f32.mrb[0].mxu0
    %322 = vmatprep.mubr.bf16.mxu0 0
    %323 = vmatmul.mubr.bf16.gmra.mrb[0].mxu0 %v205
    %v324 = vpop.f32.mrb[0].mxu0
    %v325 = vadd.f32 0.0, %v324
    %v326 = vpop.f32.mrb[0].mxu0
    %v327 = vpop.f32.mrb[0].mxu0
    %v328 = vadd.f32 0.0, %v327
    %v329 = vpop.f32.mrb[0].mxu0
    %330 = vmatprep.mubr.bf16.mxu0 0
    %331 = vmatmul.mubr.bf16.gmra.mrb[0].mxu0 %v206
    %v332 = vpop.f32.mrb[0].mxu0
    %v333 = vadd.f32 0.0, %v332
    %v334 = vpop.f32.mrb[0].mxu0
    %v335 = vpop.f32.mrb[0].mxu0
    %v336 = vadd.f32 0.0, %v335
    %v337 = vpop.f32.mrb[0].mxu0
    %338 = vmatprep.mubr.bf16.mxu0 0
    %339 = vmatmul.mubr.bf16.gmra.mrb[0].mxu0 %v207
    %v340 = vpop.f32.mrb[0].mxu0
    %v341 = vadd.f32 0.0, %v340
    %v342 = vpop.f32.mrb[0].mxu0
    %v343 = vpop.f32.mrb[0].mxu0
    %v344 = vadd.f32 0.0, %v343
    %v345 = vpop.f32.mrb[0].mxu0
    %346 = vmatprep.mubr.bf16.mxu0 0
    %347 = vmatmul.mubr.bf16.gmra.mrb[0].mxu0 %v208
    %v348 = vpop.f32.mrb[0].mxu0
    %v349 = vadd.f32 0.0, %v348
    %v350 = vpop.f32.mrb[0].mxu0
    %v351 = vpop.f32.mrb[0].mxu0
    %v352 = vadd.f32 0.0, %v351
    %v353 = vpop.f32.mrb[0].mxu0
    %354 = vmatprep.mubr.bf16.mxu0 0
    %355 = vmatmul.mubr.bf16.gmra.mrb[0].mxu0 %v209
    %v356 = vpop.f32.mrb[0].mxu0
    %v357 = vadd.f32 0.0, %v356
    %v358 = vpop.f32.mrb[0].mxu0
    %v359 = vpop.f32.mrb[0].mxu0
    %v360 = vadd.f32 0.0, %v359
    %v361 = vpop.f32.mrb[0].mxu0
    %362 = vdwg.mxu0
    %v363 = vpack.c.bf16 %v304, %v301
    %v364 = vpack.c.bf16 %v312, %v309
    %v365 = vpack.c.bf16 %v320, %v317
    %v366 = vpack.c.bf16 %v328, %v325
    %v367 = vpack.c.bf16 %v336, %v333
    %v368 = vpack.c.bf16 %v344, %v341
    %v369 = vpack.c.bf16 %v352, %v349
    %v370 = vpack.c.bf16 %v360, %v357
    %v371 = vld [vmem:[%s3] sm:$0x1]
    %v373 = vlaneseq
    %v374 = vshrl.u32 %v373, 7
    %v375 = vsub.s32 0, %v374
    %v376 = vrot.slane %v371, %v375
    %v394 = vunpack.c.l.b16 %v122
    %v395 = vunpack.c.l.b16 %v123
    %v396 = vunpack.c.l.b16 %v124
    %v397 = vunpack.c.l.b16 %v125
    %v398 = vunpack.c.l.b16 %v126
    %v399 = vunpack.c.l.b16 %v127
    %v400 = vunpack.c.l.b16 %v128
    %v401 = vunpack.c.l.b16 %v129
    %v402 = vunpack.c.l.b16 %v130
    %v403 = vunpack.c.l.b16 %v131
    %v404 = vunpack.c.l.b16 %v132
    %v405 = vunpack.c.l.b16 %v133
    %v406 = vunpack.c.l.b16 %v134
    %v407 = vunpack.c.l.b16 %v135
    %v408 = vunpack.c.l.b16 %v136
    %v409 = vunpack.c.l.b16 %v137
    %v410 = vpack.c.b16 %v395, %v394
    %v411 = vpack.c.b16 %v397, %v396
    %v412 = vpack.c.b16 %v399, %v398
    %v413 = vpack.c.b16 %v401, %v400
    %v414 = vpack.c.b16 %v403, %v402
    %v415 = vpack.c.b16 %v405, %v404
    %v416 = vpack.c.b16 %v407, %v406
    %v417 = vpack.c.b16 %v409, %v408
    %426 = vmatprep.subr.bf16.mxu0 0
    %427 = vmatpush1.bf16.msra.mxu0 %v363
    %428 = vmatprep.subr.bf16.mxu0 0
    %429 = vmatpush1.bf16.msra.mxu0 %v364
    %430 = vmatprep.subr.bf16.mxu0 0
    %431 = vmatpush1.bf16.msra.mxu0 %v365
    %432 = vmatprep.subr.bf16.mxu0 0
    %433 = vmatpush1.bf16.msra.mxu0 %v366
    %434 = vmatprep.subr.bf16.mxu0 0
    %435 = vmatpush1.bf16.msra.mxu0 %v367
    %436 = vmatprep.subr.bf16.mxu0 0
    %437 = vmatpush1.bf16.msra.mxu0 %v368
    %438 = vmatprep.subr.bf16.mxu0 0
    %439 = vmatpush1.bf16.msra.mxu0 %v369
    %440 = vmatprep.subr.bf16.mxu0 0
    %441 = vmatpush1.bf16.msra.mxu0 %v370
    %442 = vmatprep.subr.bf16.mxu0 0
    %443 = vmatpush1.bf16.msra.mxu0 0
    %444 = vmatprep.subr.bf16.mxu0 0
    %445 = vmatpush1.bf16.msra.mxu0 0
    %446 = vmatprep.subr.bf16.mxu0 0
    %447 = vmatpush1.bf16.msra.mxu0 0
    %448 = vmatprep.subr.bf16.mxu0 0
    %449 = vmatpush1.bf16.msra.mxu0 0
    %450 = vmatprep.subr.bf16.mxu0 0
    %451 = vmatpush1.bf16.msra.mxu0 0
    %452 = vmatprep.subr.bf16.mxu0 0
    %453 = vmatpush1.bf16.msra.mxu0 0
    %454 = vmatprep.subr.bf16.mxu0 0
    %455 = vmatpush1.bf16.msra.mxu0 0
    %456 = vmatprep.subr.bf16.mxu0 0
    %457 = vmatpush1.bf16.msra.mxu0 0
    %458 = vmatprep.mubr.bf16.mxu0 0
    %459 = vmatmul.mubr.bf16.gmra.mrb[0].mxu0 %v410
    %v460 = vpop.f32.mrb[0].mxu0
    %v461 = vadd.f32 %v376, %v460
    %v462 = vpop.f32.mrb[0].mxu0
    %v463 = vpop.f32.mrb[0].mxu0
    %v464 = vadd.f32 %v376, %v463
    %v465 = vpop.f32.mrb[0].mxu0
    %466 = vmatprep.mubr.bf16.mxu0 0
    %467 = vmatmul.mubr.bf16.gmra.mrb[0].mxu0 %v411
    %v468 = vpop.f32.mrb[0].mxu0
    %v469 = vadd.f32 %v376, %v468
    %v470 = vpop.f32.mrb[0].mxu0
    %v471 = vpop.f32.mrb[0].mxu0
    %v472 = vadd.f32 %v376, %v471
    %v473 = vpop.f32.mrb[0].mxu0
    %474 = vmatprep.mubr.bf16.mxu0 0
    %475 = vmatmul.mubr.bf16.gmra.mrb[0].mxu0 %v412
    %v476 = vpop.f32.mrb[0].mxu0
    %v477 = vadd.f32 %v376, %v476
    %v478 = vpop.f32.mrb[0].mxu0
    %v479 = vpop.f32.mrb[0].mxu0
    %v480 = vadd.f32 %v376, %v479
    %v481 = vpop.f32.mrb[0].mxu0
    %482 = vmatprep.mubr.bf16.mxu0 0
    %483 = vmatmul.mubr.bf16.gmra.mrb[0].mxu0 %v413
    %v484 = vpop.f32.mrb[0].mxu0
    %v485 = vadd.f32 %v376, %v484
    %v486 = vpop.f32.mrb[0].mxu0
    %v487 = vpop.f32.mrb[0].mxu0
    %v488 = vadd.f32 %v376, %v487
    %v489 = vpop.f32.mrb[0].mxu0
    %490 = vmatprep.mubr.bf16.mxu0 0
    %491 = vmatmul.mubr.bf16.gmra.mrb[0].mxu0 %v414
    %v492 = vpop.f32.mrb[0].mxu0
    %v493 = vadd.f32 %v376, %v492
    %v494 = vpop.f32.mrb[0].mxu0
    %v495 = vpop.f32.mrb[0].mxu0
    %v496 = vadd.f32 %v376, %v495
    %v497 = vpop.f32.mrb[0].mxu0
    %498 = vmatprep.mubr.bf16.mxu0 0
    %499 = vmatmul.mubr.bf16.gmra.mrb[0].mxu0 %v415
    %v500 = vpop.f32.mrb[0].mxu0
    %v501 = vadd.f32 %v376, %v500
    %v502 = vpop.f32.mrb[0].mxu0
    %v503 = vpop.f32.mrb[0].mxu0
    %v504 = vadd.f32 %v376, %v503
    %v505 = vpop.f32.mrb[0].mxu0
    %506 = vmatprep.mubr.bf16.mxu0 0
    %507 = vmatmul.mubr.bf16.gmra.mrb[0].mxu0 %v416
    %v508 = vpop.f32.mrb[0].mxu0
    %v509 = vadd.f32 %v376, %v508
    %v510 = vpop.f32.mrb[0].mxu0
    %v511 = vpop.f32.mrb[0].mxu0
    %v512 = vadd.f32 %v376, %v511
    %v513 = vpop.f32.mrb[0].mxu0
    %514 = vmatprep.mubr.bf16.mxu0 0
    %515 = vmatmul.mubr.bf16.gmra.mrb[0].mxu0 %v417
    %v516 = vpop.f32.mrb[0].mxu0
    %v517 = vadd.f32 %v376, %v516
    %v518 = vpop.f32.mrb[0].mxu0
    %v519 = vpop.f32.mrb[0].mxu0
    %v520 = vadd.f32 %v376, %v519
    %v521 = vpop.f32.mrb[0].mxu0
    %522 = vdwg.mxu0
    %v523 = vmax.f32 %v461, 0.0
    %v524 = vmax.f32 %v464, 0.0
    %v525 = vmax.f32 %v469, 0.0
    %v526 = vmax.f32 %v472, 0.0
    %v527 = vmax.f32 %v477, 0.0
    %v528 = vmax.f32 %v480, 0.0
    %v529 = vmax.f32 %v485, 0.0
    %v530 = vmax.f32 %v488, 0.0
    %v531 = vmax.f32 %v493, 0.0
    %v532 = vmax.f32 %v496, 0.0
    %v533 = vmax.f32 %v501, 0.0
    %v534 = vmax.f32 %v504, 0.0
    %v535 = vmax.f32 %v509, 0.0
    %v536 = vmax.f32 %v512, 0.0
    %v537 = vmax.f32 %v517, 0.0
    %v538 = vmax.f32 %v520, 0.0
    %v539 = vpack.c.bf16 %v524, %v523
    %v540 = vpack.c.bf16 %v526, %v525
    %v541 = vpack.c.bf16 %v528, %v527
    %v542 = vpack.c.bf16 %v530, %v529
    %v543 = vpack.c.bf16 %v532, %v531
    %v544 = vpack.c.bf16 %v534, %v533
    %v545 = vpack.c.bf16 %v536, %v535
    %v546 = vpack.c.bf16 %v538, %v537
    %v547 = vld [vmem:[#allocation8] sm:$0xf]
    %v548 = vld [vmem:[#allocation8 + $0x4] sm:$0xf]
    %v549 = vld [vmem:[#allocation8 + $0x8] sm:$0xf]
    %v550 = vld [vmem:[#allocation8 + $0xc] sm:$0xf]
    %v551 = vld [vmem:[#allocation8 + $0x10] sm:$0xf]
    %v552 = vld [vmem:[#allocation8 + $0x14] sm:$0xf]
    %v553 = vld [vmem:[#allocation8 + $0x18] sm:$0xf]
    %v554 = vld [vmem:[#allocation8 + $0x1c] sm:$0xf]
    %v555 = vld [vmem:[#allocation8 + $0x20] sm:$0xf]
    %v556 = vld [vmem:[#allocation8 + $0x24] sm:$0xf]
    %v557 = vld [vmem:[#allocation8 + $0x28] sm:$0xf]
    %v558 = vld [vmem:[#allocation8 + $0x2c] sm:$0xf]
    %v559 = vld [vmem:[#allocation8 + $0x30] sm:$0xf]
    %v560 = vld [vmem:[#allocation8 + $0x34] sm:$0xf]
    %v561 = vld [vmem:[#allocation8 + $0x38] sm:$0xf]
    %v562 = vld [vmem:[#allocation8 + $0x3c] sm:$0xf]
    %v579 = vunpack.c.l.b16 %v547
    %v580 = vunpack.c.l.b16 %v548
    %v581 = vunpack.c.l.b16 %v549
    %v582 = vunpack.c.l.b16 %v550
    %v583 = vunpack.c.l.b16 %v551
    %v584 = vunpack.c.l.b16 %v552
    %v585 = vunpack.c.l.b16 %v553
    %v586 = vunpack.c.l.b16 %v554
    %v587 = vunpack.c.l.b16 %v555
    %v588 = vunpack.c.l.b16 %v556
    %v589 = vunpack.c.l.b16 %v557
    %v590 = vunpack.c.l.b16 %v558
    %v591 = vunpack.c.l.b16 %v559
    %v592 = vunpack.c.l.b16 %v560
    %v593 = vunpack.c.l.b16 %v561
    %v594 = vunpack.c.l.b16 %v562
    %v595 = vpack.c.b16 %v580, %v579
    %v596 = vpack.c.b16 %v582, %v581
    %v597 = vpack.c.b16 %v584, %v583
    %v598 = vpack.c.b16 %v586, %v585
    %v599 = vpack.c.b16 %v588, %v587
    %v600 = vpack.c.b16 %v590, %v589
    %v601 = vpack.c.b16 %v592, %v591
    %v602 = vpack.c.b16 %v594, %v593
    %611 = vmatprep.subr.bf16.mxu0 0
    %612 = vmatpush1.bf16.msra.mxu0 %v595
    %613 = vmatprep.subr.bf16.mxu0 0
    %614 = vmatpush1.bf16.msra.mxu0 %v596
    %615 = vmatprep.subr.bf16.mxu0 0
    %616 = vmatpush1.bf16.msra.mxu0 %v597
    %617 = vmatprep.subr.bf16.mxu0 0
    %618 = vmatpush1.bf16.msra.mxu0 %v598
    %619 = vmatprep.subr.bf16.mxu0 0
    %620 = vmatpush1.bf16.msra.mxu0 %v599
    %621 = vmatprep.subr.bf16.mxu0 0
    %622 = vmatpush1.bf16.msra.mxu0 %v600
    %623 = vmatprep.subr.bf16.mxu0 0
    %624 = vmatpush1.bf16.msra.mxu0 %v601
    %625 = vmatprep.subr.bf16.mxu0 0
    %626 = vmatpush1.bf16.msra.mxu0 %v602
    %627 = vmatprep.subr.bf16.mxu0 0
    %628 = vmatpush1.bf16.msra.mxu0 0
    %629 = vmatprep.subr.bf16.mxu0 0
    %630 = vmatpush1.bf16.msra.mxu0 0
    %631 = vmatprep.subr.bf16.mxu0 0
    %632 = vmatpush1.bf16.msra.mxu0 0
    %633 = vmatprep.subr.bf16.mxu0 0
    %634 = vmatpush1.bf16.msra.mxu0 0
    %635 = vmatprep.subr.bf16.mxu0 0
    %636 = vmatpush1.bf16.msra.mxu0 0
    %637 = vmatprep.subr.bf16.mxu0 0
    %638 = vmatpush1.bf16.msra.mxu0 0
    %639 = vmatprep.subr.bf16.mxu0 0
    %640 = vmatpush1.bf16.msra.mxu0 0
    %641 = vmatprep.subr.bf16.mxu0 0
    %642 = vmatpush1.bf16.msra.mxu0 0
    %643 = vmatprep.mubr.bf16.mxu0 0
    %644 = vmatmul.mubr.bf16.gmra.mrb[0].mxu0 %v539
    %v645 = vpop.f32.mrb[0].mxu0
    %v646 = vadd.f32 0.0, %v645
    %v647 = vpop.f32.mrb[0].mxu0
    %v648 = vpop.f32.mrb[0].mxu0
    %v649 = vadd.f32 0.0, %v648
    %v650 = vpop.f32.mrb[0].mxu0
    %651 = vmatprep.mubr.bf16.mxu0 0
    %652 = vmatmul.mubr.bf16.gmra.mrb[0].mxu0 %v540
    %v653 = vpop.f32.mrb[0].mxu0
    %v654 = vadd.f32 0.0, %v653
    %v655 = vpop.f32.mrb[0].mxu0
    %v656 = vpop.f32.mrb[0].mxu0
    %v657 = vadd.f32 0.0, %v656
    %v658 = vpop.f32.mrb[0].mxu0
    %659 = vmatprep.mubr.bf16.mxu0 0
    %660 = vmatmul.mubr.bf16.gmra.mrb[0].mxu0 %v541
    %v661 = vpop.f32.mrb[0].mxu0
    %v662 = vadd.f32 0.0, %v661
    %v663 = vpop.f32.mrb[0].mxu0
    %v664 = vpop.f32.mrb[0].mxu0
    %v665 = vadd.f32 0.0, %v664
    %v666 = vpop.f32.mrb[0].mxu0
    %667 = vmatprep.mubr.bf16.mxu0 0
    %668 = vmatmul.mubr.bf16.gmra.mrb[0].mxu0 %v542
    %v669 = vpop.f32.mrb[0].mxu0
    %v670 = vadd.f32 0.0, %v669
    %v671 = vpop.f32.mrb[0].mxu0
    %v672 = vpop.f32.mrb[0].mxu0
    %v673 = vadd.f32 0.0, %v672
    %v674 = vpop.f32.mrb[0].mxu0
    %675 = vmatprep.mubr.bf16.mxu0 0
    %676 = vmatmul.mubr.bf16.gmra.mrb[0].mxu0 %v543
    %v677 = vpop.f32.mrb[0].mxu0
    %v678 = vadd.f32 0.0, %v677
    %v679 = vpop.f32.mrb[0].mxu0
    %v680 = vpop.f32.mrb[0].mxu0
    %v681 = vadd.f32 0.0, %v680
    %v682 = vpop.f32.mrb[0].mxu0
    %683 = vmatprep.mubr.bf16.mxu0 0
    %684 = vmatmul.mubr.bf16.gmra.mrb[0].mxu0 %v544
    %v685 = vpop.f32.mrb[0].mxu0
    %v686 = vadd.f32 0.0, %v685
    %v687 = vpop.f32.mrb[0].mxu0
    %v688 = vpop.f32.mrb[0].mxu0
    %v689 = vadd.f32 0.0, %v688
    %v690 = vpop.f32.mrb[0].mxu0
    %691 = vmatprep.mubr.bf16.mxu0 0
    %692 = vmatmul.mubr.bf16.gmra.mrb[0].mxu0 %v545
    %v693 = vpop.f32.mrb[0].mxu0
    %v694 = vadd.f32 0.0, %v693
    %v695 = vpop.f32.mrb[0].mxu0
    %v696 = vpop.f32.mrb[0].mxu0
    %v697 = vadd.f32 0.0, %v696
    %v698 = vpop.f32.mrb[0].mxu0
    %699 = vmatprep.mubr.bf16.mxu0 0
    %700 = vmatmul.mubr.bf16.gmra.mrb[0].mxu0 %v546
    %v701 = vpop.f32.mrb[0].mxu0
    %v702 = vadd.f32 0.0, %v701
    %v703 = vpop.f32.mrb[0].mxu0
    %v704 = vpop.f32.mrb[0].mxu0
    %v705 = vadd.f32 0.0, %v704
    %v706 = vpop.f32.mrb[0].mxu0
    %707 = vdwg.mxu0
    %v708 = vpack.c.bf16 %v649, %v646
    %v709 = vpack.c.bf16 %v657, %v654
    %v710 = vpack.c.bf16 %v665, %v662
    %v711 = vpack.c.bf16 %v673, %v670
    %v712 = vpack.c.bf16 %v681, %v678
    %v713 = vpack.c.bf16 %v689, %v686
    %v714 = vpack.c.bf16 %v697, %v694
    %v715 = vpack.c.bf16 %v705, %v702
    %v716 = vld [vmem:[%s5] sm:$0x1]
    %v718 = vlaneseq
    %v719 = vshrl.u32 %v718, 7
    %v720 = vsub.s32 0, %v719
    %v721 = vrot.slane %v716, %v720
    %723 = vmatprep.subr.bf16.mxu0 0
    %724 = vmatpush1.bf16.msra.mxu0 %v708
    %725 = vmatprep.subr.bf16.mxu0 0
    %726 = vmatpush1.bf16.msra.mxu0 %v709
    %727 = vmatprep.subr.bf16.mxu0 0
    %728 = vmatpush1.bf16.msra.mxu0 %v710
    %729 = vmatprep.subr.bf16.mxu0 0
    %730 = vmatpush1.bf16.msra.mxu0 %v711
    %731 = vmatprep.subr.bf16.mxu0 0
    %732 = vmatpush1.bf16.msra.mxu0 %v712
    %733 = vmatprep.subr.bf16.mxu0 0
    %734 = vmatpush1.bf16.msra.mxu0 %v713
    %735 = vmatprep.subr.bf16.mxu0 0
    %736 = vmatpush1.bf16.msra.mxu0 %v714
    %737 = vmatprep.subr.bf16.mxu0 0
    %738 = vmatpush1.bf16.msra.mxu0 %v715
    %739 = vmatprep.subr.bf16.mxu0 0
    %740 = vmatpush1.bf16.msra.mxu0 0
    %741 = vmatprep.subr.bf16.mxu0 0
    %742 = vmatpush1.bf16.msra.mxu0 0
    %743 = vmatprep.subr.bf16.mxu0 0
    %744 = vmatpush1.bf16.msra.mxu0 0
    %745 = vmatprep.subr.bf16.mxu0 0
    %746 = vmatpush1.bf16.msra.mxu0 0
    %747 = vmatprep.subr.bf16.mxu0 0
    %748 = vmatpush1.bf16.msra.mxu0 0
    %749 = vmatprep.subr.bf16.mxu0 0
    %750 = vmatpush1.bf16.msra.mxu0 0
    %751 = vmatprep.subr.bf16.mxu0 0
    %752 = vmatpush1.bf16.msra.mxu0 0
    %753 = vmatprep.subr.bf16.mxu0 0
    %754 = vmatpush1.bf16.msra.mxu0 0
    %755 = vmatprep.mubr.bf16.mxu0 0
    %756 = vmatmul.mubr.bf16.gmra.mrb[0].mxu0 %v410
    %v757 = vpop.f32.mrb[0].mxu0
    %v758 = vadd.f32 %v721, %v757
    %v759 = vpop.f32.mrb[0].mxu0
    %v760 = vpop.f32.mrb[0].mxu0
    %v761 = vadd.f32 %v721, %v760
    %v762 = vpop.f32.mrb[0].mxu0
    %763 = vmatprep.mubr.bf16.mxu0 0
    %764 = vmatmul.mubr.bf16.gmra.mrb[0].mxu0 %v411
    %v765 = vpop.f32.mrb[0].mxu0
    %v766 = vadd.f32 %v721, %v765
    %v767 = vpop.f32.mrb[0].mxu0
    %v768 = vpop.f32.mrb[0].mxu0
    %v769 = vadd.f32 %v721, %v768
    %v770 = vpop.f32.mrb[0].mxu0
    %771 = vmatprep.mubr.bf16.mxu0 0
    %772 = vmatmul.mubr.bf16.gmra.mrb[0].mxu0 %v412
    %v773 = vpop.f32.mrb[0].mxu0
    %v774 = vadd.f32 %v721, %v773
    %v775 = vpop.f32.mrb[0].mxu0
    %v776 = vpop.f32.mrb[0].mxu0
    %v777 = vadd.f32 %v721, %v776
    %v778 = vpop.f32.mrb[0].mxu0
    %779 = vmatprep.mubr.bf16.mxu0 0
    %780 = vmatmul.mubr.bf16.gmra.mrb[0].mxu0 %v413
    %v781 = vpop.f32.mrb[0].mxu0
    %v782 = vadd.f32 %v721, %v781
    %v783 = vpop.f32.mrb[0].mxu0
    %v784 = vpop.f32.mrb[0].mxu0
    %v785 = vadd.f32 %v721, %v784
    %v786 = vpop.f32.mrb[0].mxu0
    %787 = vmatprep.mubr.bf16.mxu0 0
    %788 = vmatmul.mubr.bf16.gmra.mrb[0].mxu0 %v414
    %v789 = vpop.f32.mrb[0].mxu0
    %v790 = vadd.f32 %v721, %v789
    %v791 = vpop.f32.mrb[0].mxu0
    %v792 = vpop.f32.mrb[0].mxu0
    %v793 = vadd.f32 %v721, %v792
    %v794 = vpop.f32.mrb[0].mxu0
    %795 = vmatprep.mubr.bf16.mxu0 0
    %796 = vmatmul.mubr.bf16.gmra.mrb[0].mxu0 %v415
    %v797 = vpop.f32.mrb[0].mxu0
    %v798 = vadd.f32 %v721, %v797
    %v799 = vpop.f32.mrb[0].mxu0
    %v800 = vpop.f32.mrb[0].mxu0
    %v801 = vadd.f32 %v721, %v800
    %v802 = vpop.f32.mrb[0].mxu0
    %803 = vmatprep.mubr.bf16.mxu0 0
    %804 = vmatmul.mubr.bf16.gmra.mrb[0].mxu0 %v416
    %v805 = vpop.f32.mrb[0].mxu0
    %v806 = vadd.f32 %v721, %v805
    %v807 = vpop.f32.mrb[0].mxu0
    %v808 = vpop.f32.mrb[0].mxu0
    %v809 = vadd.f32 %v721, %v808
    %v810 = vpop.f32.mrb[0].mxu0
    %811 = vmatprep.mubr.bf16.mxu0 0
    %812 = vmatmul.mubr.bf16.gmra.mrb[0].mxu0 %v417
    %v813 = vpop.f32.mrb[0].mxu0
    %v814 = vadd.f32 %v721, %v813
    %v815 = vpop.f32.mrb[0].mxu0
    %v816 = vpop.f32.mrb[0].mxu0
    %v817 = vadd.f32 %v721, %v816
    %v818 = vpop.f32.mrb[0].mxu0
    %819 = vdwg.mxu0
    %v820 = vmax.f32 %v758, 0.0
    %v821 = vmax.f32 %v761, 0.0
    %v822 = vmax.f32 %v766, 0.0
    %v823 = vmax.f32 %v769, 0.0
    %v824 = vmax.f32 %v774, 0.0
    %v825 = vmax.f32 %v777, 0.0
    %v826 = vmax.f32 %v782, 0.0
    %v827 = vmax.f32 %v785, 0.0
    %v828 = vmax.f32 %v790, 0.0
    %v829 = vmax.f32 %v793, 0.0
    %v830 = vmax.f32 %v798, 0.0
    %v831 = vmax.f32 %v801, 0.0
    %v832 = vmax.f32 %v806, 0.0
    %v833 = vmax.f32 %v809, 0.0
    %v834 = vmax.f32 %v814, 0.0
    %v835 = vmax.f32 %v817, 0.0
    %v836 = vpack.c.bf16 %v821, %v820
    %v837 = vpack.c.bf16 %v823, %v822
    %v838 = vpack.c.bf16 %v825, %v824
    %v839 = vpack.c.bf16 %v827, %v826
    %v840 = vpack.c.bf16 %v829, %v828
    %v841 = vpack.c.bf16 %v831, %v830
    %v842 = vpack.c.bf16 %v833, %v832
    %v843 = vpack.c.bf16 %v835, %v834
    %v844 = vld [vmem:[#allocation10] sm:$0xf]
    %v845 = vld [vmem:[#allocation10 + $0x4] sm:$0xf]
    %v846 = vld [vmem:[#allocation10 + $0x8] sm:$0xf]
    %v847 = vld [vmem:[#allocation10 + $0xc] sm:$0xf]
    %v848 = vld [vmem:[#allocation10 + $0x10] sm:$0xf]
    %v849 = vld [vmem:[#allocation10 + $0x14] sm:$0xf]
    %v850 = vld [vmem:[#allocation10 + $0x18] sm:$0xf]
    %v851 = vld [vmem:[#allocation10 + $0x1c] sm:$0xf]
    %v852 = vld [vmem:[#allocation10 + $0x20] sm:$0xf]
    %v853 = vld [vmem:[#allocation10 + $0x24] sm:$0xf]
    %v854 = vld [vmem:[#allocation10 + $0x28] sm:$0xf]
    %v855 = vld [vmem:[#allocation10 + $0x2c] sm:$0xf]
    %v856 = vld [vmem:[#allocation10 + $0x30] sm:$0xf]
    %v857 = vld [vmem:[#allocation10 + $0x34] sm:$0xf]
    %v858 = vld [vmem:[#allocation10 + $0x38] sm:$0xf]
    %v859 = vld [vmem:[#allocation10 + $0x3c] sm:$0xf]
    %v876 = vunpack.c.l.b16 %v844
    %v877 = vunpack.c.l.b16 %v845
    %v878 = vunpack.c.l.b16 %v846
    %v879 = vunpack.c.l.b16 %v847
    %v880 = vunpack.c.l.b16 %v848
    %v881 = vunpack.c.l.b16 %v849
    %v882 = vunpack.c.l.b16 %v850
    %v883 = vunpack.c.l.b16 %v851
    %v884 = vunpack.c.l.b16 %v852
    %v885 = vunpack.c.l.b16 %v853
    %v886 = vunpack.c.l.b16 %v854
    %v887 = vunpack.c.l.b16 %v855
    %v888 = vunpack.c.l.b16 %v856
    %v889 = vunpack.c.l.b16 %v857
    %v890 = vunpack.c.l.b16 %v858
    %v891 = vunpack.c.l.b16 %v859
    %v892 = vpack.c.b16 %v877, %v876
    %v893 = vpack.c.b16 %v879, %v878
    %v894 = vpack.c.b16 %v881, %v880
    %v895 = vpack.c.b16 %v883, %v882
    %v896 = vpack.c.b16 %v885, %v884
    %v897 = vpack.c.b16 %v887, %v886
    %v898 = vpack.c.b16 %v889, %v888
    %v899 = vpack.c.b16 %v891, %v890
    %908 = vmatprep.subr.bf16.mxu0 0
    %909 = vmatpush1.bf16.msra.mxu0 %v892
    %910 = vmatprep.subr.bf16.mxu0 0
    %911 = vmatpush1.bf16.msra.mxu0 %v893
    %912 = vmatprep.subr.bf16.mxu0 0
    %913 = vmatpush1.bf16.msra.mxu0 %v894
    %914 = vmatprep.subr.bf16.mxu0 0
    %915 = vmatpush1.bf16.msra.mxu0 %v895
    %916 = vmatprep.subr.bf16.mxu0 0
    %917 = vmatpush1.bf16.msra.mxu0 %v896
    %918 = vmatprep.subr.bf16.mxu0 0
    %919 = vmatpush1.bf16.msra.mxu0 %v897
    %920 = vmatprep.subr.bf16.mxu0 0
    %921 = vmatpush1.bf16.msra.mxu0 %v898
    %922 = vmatprep.subr.bf16.mxu0 0
    %923 = vmatpush1.bf16.msra.mxu0 %v899
    %924 = vmatprep.subr.bf16.mxu0 0
    %925 = vmatpush1.bf16.msra.mxu0 0
    %926 = vmatprep.subr.bf16.mxu0 0
    %927 = vmatpush1.bf16.msra.mxu0 0
    %928 = vmatprep.subr.bf16.mxu0 0
    %929 = vmatpush1.bf16.msra.mxu0 0
    %930 = vmatprep.subr.bf16.mxu0 0
    %931 = vmatpush1.bf16.msra.mxu0 0
    %932 = vmatprep.subr.bf16.mxu0 0
    %933 = vmatpush1.bf16.msra.mxu0 0
    %934 = vmatprep.subr.bf16.mxu0 0
    %935 = vmatpush1.bf16.msra.mxu0 0
    %936 = vmatprep.subr.bf16.mxu0 0
    %937 = vmatpush1.bf16.msra.mxu0 0
    %938 = vmatprep.subr.bf16.mxu0 0
    %939 = vmatpush1.bf16.msra.mxu0 0
    %940 = vmatprep.mubr.bf16.mxu0 0
    %941 = vmatmul.mubr.bf16.gmra.mrb[0].mxu0 %v836
    %v942 = vpop.f32.mrb[0].mxu0
    %v943 = vadd.f32 0.0, %v942
    %v944 = vpop.f32.mrb[0].mxu0
    %v945 = vpop.f32.mrb[0].mxu0
    %v946 = vadd.f32 0.0, %v945
    %v947 = vpop.f32.mrb[0].mxu0
    %948 = vmatprep.mubr.bf16.mxu0 0
    %949 = vmatmul.mubr.bf16.gmra.mrb[0].mxu0 %v837
    %v950 = vpop.f32.mrb[0].mxu0
    %v951 = vadd.f32 0.0, %v950
    %v952 = vpop.f32.mrb[0].mxu0
    %v953 = vpop.f32.mrb[0].mxu0
    %v954 = vadd.f32 0.0, %v953
    %v955 = vpop.f32.mrb[0].mxu0
    %956 = vmatprep.mubr.bf16.mxu0 0
    %957 = vmatmul.mubr.bf16.gmra.mrb[0].mxu0 %v838
    %v958 = vpop.f32.mrb[0].mxu0
    %v959 = vadd.f32 0.0, %v958
    %v960 = vpop.f32.mrb[0].mxu0
    %v961 = vpop.f32.mrb[0].mxu0
    %v962 = vadd.f32 0.0, %v961
    %v963 = vpop.f32.mrb[0].mxu0
    %964 = vmatprep.mubr.bf16.mxu0 0
    %965 = vmatmul.mubr.bf16.gmra.mrb[0].mxu0 %v839
    %v966 = vpop.f32.mrb[0].mxu0
    %v967 = vadd.f32 0.0, %v966
    %v968 = vpop.f32.mrb[0].mxu0
    %v969 = vpop.f32.mrb[0].mxu0
    %v970 = vadd.f32 0.0, %v969
    %v971 = vpop.f32.mrb[0].mxu0
    %972 = vmatprep.mubr.bf16.mxu0 0
    %973 = vmatmul.mubr.bf16.gmra.mrb[0].mxu0 %v840
    %v974 = vpop.f32.mrb[0].mxu0
    %v975 = vadd.f32 0.0, %v974
    %v976 = vpop.f32.mrb[0].mxu0
    %v977 = vpop.f32.mrb[0].mxu0
    %v978 = vadd.f32 0.0, %v977
    %v979 = vpop.f32.mrb[0].mxu0
    %980 = vmatprep.mubr.bf16.mxu0 0
    %981 = vmatmul.mubr.bf16.gmra.mrb[0].mxu0 %v841
    %v982 = vpop.f32.mrb[0].mxu0
    %v983 = vadd.f32 0.0, %v982
    %v984 = vpop.f32.mrb[0].mxu0
    %v985 = vpop.f32.mrb[0].mxu0
    %v986 = vadd.f32 0.0, %v985
    %v987 = vpop.f32.mrb[0].mxu0
    %988 = vmatprep.mubr.bf16.mxu0 0
    %989 = vmatmul.mubr.bf16.gmra.mrb[0].mxu0 %v842
    %v990 = vpop.f32.mrb[0].mxu0
    %v991 = vadd.f32 0.0, %v990
    %v992 = vpop.f32.mrb[0].mxu0
    %v993 = vpop.f32.mrb[0].mxu0
    %v994 = vadd.f32 0.0, %v993
    %v995 = vpop.f32.mrb[0].mxu0
    %996 = vmatprep.mubr.bf16.mxu0 0
    %997 = vmatmul.mubr.bf16.gmra.mrb[0].mxu0 %v843
    %v998 = vpop.f32.mrb[0].mxu0
    %v999 = vadd.f32 0.0, %v998
    %v1000 = vpop.f32.mrb[0].mxu0
    %v1001 = vpop.f32.mrb[0].mxu0
    %v1002 = vadd.f32 0.0, %v1001
    %v1003 = vpop.f32.mrb[0].mxu0
    %1004 = vdwg.mxu0
    %v1005 = vpack.c.bf16 %v946, %v943
    %v1006 = vpack.c.bf16 %v954, %v951
    %v1007 = vpack.c.bf16 %v962, %v959
    %v1008 = vpack.c.bf16 %v970, %v967
    %v1009 = vpack.c.bf16 %v978, %v975
    %v1010 = vpack.c.bf16 %v986, %v983
    %v1011 = vpack.c.bf16 %v994, %v991
    %v1012 = vpack.c.bf16 %v1002, %v999
    %v1013 = vld [vmem:[%s7] sm:$0x1]
    %v1015 = vlaneseq
    %v1016 = vshrl.u32 %v1015, 7
    %v1017 = vsub.s32 0, %v1016
    %v1018 = vrot.slane %v1013, %v1017
    %1020 = vmatprep.subr.bf16.mxu0 0
    %1021 = vmatpush1.bf16.msra.mxu0 %v1005
    %1022 = vmatprep.subr.bf16.mxu0 0
    %1023 = vmatpush1.bf16.msra.mxu0 %v1006
    %1024 = vmatprep.subr.bf16.mxu0 0
    %1025 = vmatpush1.bf16.msra.mxu0 %v1007
    %1026 = vmatprep.subr.bf16.mxu0 0
    %1027 = vmatpush1.bf16.msra.mxu0 %v1008
    %1028 = vmatprep.subr.bf16.mxu0 0
    %1029 = vmatpush1.bf16.msra.mxu0 %v1009
    %1030 = vmatprep.subr.bf16.mxu0 0
    %1031 = vmatpush1.bf16.msra.mxu0 %v1010
    %1032 = vmatprep.subr.bf16.mxu0 0
    %1033 = vmatpush1.bf16.msra.mxu0 %v1011
    %1034 = vmatprep.subr.bf16.mxu0 0
    %1035 = vmatpush1.bf16.msra.mxu0 %v1012
    %1036 = vmatprep.subr.bf16.mxu0 0
    %1037 = vmatpush1.bf16.msra.mxu0 0
    %1038 = vmatprep.subr.bf16.mxu0 0
    %1039 = vmatpush1.bf16.msra.mxu0 0
    %1040 = vmatprep.subr.bf16.mxu0 0
    %1041 = vmatpush1.bf16.msra.mxu0 0
    %1042 = vmatprep.subr.bf16.mxu0 0
    %1043 = vmatpush1.bf16.msra.mxu0 0
    %1044 = vmatprep.subr.bf16.mxu0 0
    %1045 = vmatpush1.bf16.msra.mxu0 0
    %1046 = vmatprep.subr.bf16.mxu0 0
    %1047 = vmatpush1.bf16.msra.mxu0 0
    %1048 = vmatprep.subr.bf16.mxu0 0
    %1049 = vmatpush1.bf16.msra.mxu0 0
    %1050 = vmatprep.subr.bf16.mxu0 0
    %1051 = vmatpush1.bf16.msra.mxu0 0
    %1052 = vmatprep.mubr.bf16.mxu0 0
    %1053 = vmatmul.mubr.bf16.gmra.mrb[0].mxu0 %v410
    %v1054 = vpop.f32.mrb[0].mxu0
    %v1055 = vadd.f32 %v1018, %v1054
    %v1056 = vpop.f32.mrb[0].mxu0
    %v1057 = vpop.f32.mrb[0].mxu0
    %v1058 = vadd.f32 %v1018, %v1057
    %v1059 = vpop.f32.mrb[0].mxu0
    %1060 = vmatprep.mubr.bf16.mxu0 0
    %1061 = vmatmul.mubr.bf16.gmra.mrb[0].mxu0 %v411
    %v1062 = vpop.f32.mrb[0].mxu0
    %v1063 = vadd.f32 %v1018, %v1062
    %v1064 = vpop.f32.mrb[0].mxu0
    %v1065 = vpop.f32.mrb[0].mxu0
    %v1066 = vadd.f32 %v1018, %v1065
    %v1067 = vpop.f32.mrb[0].mxu0
    %1068 = vmatprep.mubr.bf16.mxu0 0
    %1069 = vmatmul.mubr.bf16.gmra.mrb[0].mxu0 %v412
    %v1070 = vpop.f32.mrb[0].mxu0
    %v1071 = vadd.f32 %v1018, %v1070
    %v1072 = vpop.f32.mrb[0].mxu0
    %v1073 = vpop.f32.mrb[0].mxu0
    %v1074 = vadd.f32 %v1018, %v1073
    %v1075 = vpop.f32.mrb[0].mxu0
    %1076 = vmatprep.mubr.bf16.mxu0 0
    %1077 = vmatmul.mubr.bf16.gmra.mrb[0].mxu0 %v413
    %v1078 = vpop.f32.mrb[0].mxu0
    %v1079 = vadd.f32 %v1018, %v1078
    %v1080 = vpop.f32.mrb[0].mxu0
    %v1081 = vpop.f32.mrb[0].mxu0
    %v1082 = vadd.f32 %v1018, %v1081
    %v1083 = vpop.f32.mrb[0].mxu0
    %1084 = vmatprep.mubr.bf16.mxu0 0
    %1085 = vmatmul.mubr.bf16.gmra.mrb[0].mxu0 %v414
    %v1086 = vpop.f32.mrb[0].mxu0
    %v1087 = vadd.f32 %v1018, %v1086
    %v1088 = vpop.f32.mrb[0].mxu0
    %v1089 = vpop.f32.mrb[0].mxu0
    %v1090 = vadd.f32 %v1018, %v1089
    %v1091 = vpop.f32.mrb[0].mxu0
    %1092 = vmatprep.mubr.bf16.mxu0 0
    %1093 = vmatmul.mubr.bf16.gmra.mrb[0].mxu0 %v415
    %v1094 = vpop.f32.mrb[0].mxu0
    %v1095 = vadd.f32 %v1018, %v1094
    %v1096 = vpop.f32.mrb[0].mxu0
    %v1097 = vpop.f32.mrb[0].mxu0
    %v1098 = vadd.f32 %v1018, %v1097
    %v1099 = vpop.f32.mrb[0].mxu0
    %1100 = vmatprep.mubr.bf16.mxu0 0
    %1101 = vmatmul.mubr.bf16.gmra.mrb[0].mxu0 %v416
    %v1102 = vpop.f32.mrb[0].mxu0
    %v1103 = vadd.f32 %v1018, %v1102
    %v1104 = vpop.f32.mrb[0].mxu0
    %v1105 = vpop.f32.mrb[0].mxu0
    %v1106 = vadd.f32 %v1018, %v1105
    %v1107 = vpop.f32.mrb[0].mxu0
    %1108 = vmatprep.mubr.bf16.mxu0 0
    %1109 = vmatmul.mubr.bf16.gmra.mrb[0].mxu0 %v417
    %v1110 = vpop.f32.mrb[0].mxu0
    %v1111 = vadd.f32 %v1018, %v1110
    %v1112 = vpop.f32.mrb[0].mxu0
    %v1113 = vpop.f32.mrb[0].mxu0
    %v1114 = vadd.f32 %v1018, %v1113
    %v1115 = vpop.f32.mrb[0].mxu0
    %1116 = vdwg.mxu0
    %v1117 = vpack.c.bf16 %v1058, %v1055
    %v1118 = vpack.c.bf16 %v1066, %v1063
    %v1119 = vpack.c.bf16 %v1074, %v1071
    %v1120 = vpack.c.bf16 %v1082, %v1079
    %v1121 = vpack.c.bf16 %v1090, %v1087
    %v1122 = vpack.c.bf16 %v1098, %v1095
    %v1123 = vpack.c.bf16 %v1106, %v1103
    %v1124 = vpack.c.bf16 %v1114, %v1111
    %v1125 = vld [vmem:[%s8] sm:$0xf]
    %v1126 = vld [vmem:[%s8 + $0x4] sm:$0xf]
    %v1129 = vunpack.c.l.b16 %v1125
    %v1130 = vunpack.c.l.b16 %v1126
    %v1131 = vpack.c.b16 %v1130, %v1129
    %1133 = vmatprep.subr.bf16.mxu0 0
    %1134 = vmatpush1.bf16.msra.mxu0 %v1117
    %1135 = vmatprep.subr.bf16.mxu0 0
    %1136 = vmatpush1.bf16.msra.mxu0 %v1118
    %1137 = vmatprep.subr.bf16.mxu0 0
    %1138 = vmatpush1.bf16.msra.mxu0 %v1119
    %1139 = vmatprep.subr.bf16.mxu0 0
    %1140 = vmatpush1.bf16.msra.mxu0 %v1120
    %1141 = vmatprep.subr.bf16.mxu0 0
    %1142 = vmatpush1.bf16.msra.mxu0 %v1121
    %1143 = vmatprep.subr.bf16.mxu0 0
    %1144 = vmatpush1.bf16.msra.mxu0 %v1122
    %1145 = vmatprep.subr.bf16.mxu0 0
    %1146 = vmatpush1.bf16.msra.mxu0 %v1123
    %1147 = vmatprep.subr.bf16.mxu0 0
    %1148 = vmatpush1.bf16.msra.mxu0 %v1124
    %1149 = vmatprep.subr.bf16.mxu0 0
    %1150 = vmatpush1.bf16.msra.mxu0 0
    %1151 = vmatprep.subr.bf16.mxu0 0
    %1152 = vmatpush1.bf16.msra.mxu0 0
    %1153 = vmatprep.subr.bf16.mxu0 0
    %1154 = vmatpush1.bf16.msra.mxu0 0
    %1155 = vmatprep.subr.bf16.mxu0 0
    %1156 = vmatpush1.bf16.msra.mxu0 0
    %1157 = vmatprep.subr.bf16.mxu0 0
    %1158 = vmatpush1.bf16.msra.mxu0 0
    %1159 = vmatprep.subr.bf16.mxu0 0
    %1160 = vmatpush1.bf16.msra.mxu0 0
    %1161 = vmatprep.subr.bf16.mxu0 0
    %1162 = vmatpush1.bf16.msra.mxu0 0
    %1163 = vmatprep.subr.bf16.mxu0 0
    %1164 = vmatpush1.bf16.msra.mxu0 0
    %1165 = vmatprep.mubr.bf16.mxu0 0
    %1166 = vmatmul.mubr.bf16.gmra.mrb[0].mxu0 %v1131
    %v1167 = vpop.f32.mrb[0].mxu0
    %v1168 = vadd.f32 0.0, %v1167
    %v1169 = vpop.f32.mrb[0].mxu0
    %v1170 = vpop.f32.mrb[0].mxu0
    %v1171 = vadd.f32 0.0, %v1170
    %v1172 = vpop.f32.mrb[0].mxu0
    %1173 = vdwg.mxu0
    %v1174 = vpack.c.bf16 %v1171, %v1168
    %v1175 = vld [vmem:[#allocation11] sm:$0xf]
    %v1176 = vld [vmem:[#allocation11 + $0x4] sm:$0xf]
    %v1177 = vld [vmem:[#allocation11 + $0x8] sm:$0xf]
    %v1178 = vld [vmem:[#allocation11 + $0xc] sm:$0xf]
    %v1179 = vld [vmem:[#allocation11 + $0x10] sm:$0xf]
    %v1180 = vld [vmem:[#allocation11 + $0x14] sm:$0xf]
    %v1181 = vld [vmem:[#allocation11 + $0x18] sm:$0xf]
    %v1182 = vld [vmem:[#allocation11 + $0x1c] sm:$0xf]
    %v1183 = vld [vmem:[#allocation11 + $0x20] sm:$0xf]
    %v1184 = vld [vmem:[#allocation11 + $0x24] sm:$0xf]
    %v1185 = vld [vmem:[#allocation11 + $0x28] sm:$0xf]
    %v1186 = vld [vmem:[#allocation11 + $0x2c] sm:$0xf]
    %v1187 = vld [vmem:[#allocation11 + $0x30] sm:$0xf]
    %v1188 = vld [vmem:[#allocation11 + $0x34] sm:$0xf]
    %v1189 = vld [vmem:[#allocation11 + $0x38] sm:$0xf]
    %v1190 = vld [vmem:[#allocation11 + $0x3c] sm:$0xf]
    %v1191 = vld [vmem:[%s10] sm:$0x1]
    %v1193 = vlaneseq
    %v1194 = vshrl.u32 %v1193, 7
    %v1195 = vsub.s32 0, %v1194
    %v1196 = vrot.slane %v1191, %v1195
    %v1214 = vunpack.c.l.b16 %v1175
    %v1215 = vunpack.c.l.b16 %v1176
    %v1216 = vunpack.c.l.b16 %v1177
    %v1217 = vunpack.c.l.b16 %v1178
    %v1218 = vunpack.c.l.b16 %v1179
    %v1219 = vunpack.c.l.b16 %v1180
    %v1220 = vunpack.c.l.b16 %v1181
    %v1221 = vunpack.c.l.b16 %v1182
    %v1222 = vunpack.c.l.b16 %v1183
    %v1223 = vunpack.c.l.b16 %v1184
    %v1224 = vunpack.c.l.b16 %v1185
    %v1225 = vunpack.c.l.b16 %v1186
    %v1226 = vunpack.c.l.b16 %v1187
    %v1227 = vunpack.c.l.b16 %v1188
    %v1228 = vunpack.c.l.b16 %v1189
    %v1229 = vunpack.c.l.b16 %v1190
    %v1230 = vpack.c.b16 %v1215, %v1214
    %v1231 = vpack.c.b16 %v1217, %v1216
    %v1232 = vpack.c.b16 %v1219, %v1218
    %v1233 = vpack.c.b16 %v1221, %v1220
    %v1234 = vpack.c.b16 %v1223, %v1222
    %v1235 = vpack.c.b16 %v1225, %v1224
    %v1236 = vpack.c.b16 %v1227, %v1226
    %v1237 = vpack.c.b16 %v1229, %v1228
    %1246 = vmatprep.subr.bf16.mxu0 0
    %1247 = vmatpush1.bf16.msra.mxu0 %v1230
    %1248 = vmatprep.subr.bf16.mxu0 0
    %1249 = vmatpush1.bf16.msra.mxu0 %v1231
    %1250 = vmatprep.subr.bf16.mxu0 0
    %1251 = vmatpush1.bf16.msra.mxu0 %v1232
    %1252 = vmatprep.subr.bf16.mxu0 0
    %1253 = vmatpush1.bf16.msra.mxu0 %v1233
    %1254 = vmatprep.subr.bf16.mxu0 0
    %1255 = vmatpush1.bf16.msra.mxu0 %v1234
    %1256 = vmatprep.subr.bf16.mxu0 0
    %1257 = vmatpush1.bf16.msra.mxu0 %v1235
    %1258 = vmatprep.subr.bf16.mxu0 0
    %1259 = vmatpush1.bf16.msra.mxu0 %v1236
    %1260 = vmatprep.subr.bf16.mxu0 0
    %1261 = vmatpush1.bf16.msra.mxu0 %v1237
    %1262 = vmatprep.subr.bf16.mxu0 0
    %1263 = vmatpush1.bf16.msra.mxu0 0
    %1264 = vmatprep.subr.bf16.mxu0 0
    %1265 = vmatpush1.bf16.msra.mxu0 0
    %1266 = vmatprep.subr.bf16.mxu0 0
    %1267 = vmatpush1.bf16.msra.mxu0 0
    %1268 = vmatprep.subr.bf16.mxu0 0
    %1269 = vmatpush1.bf16.msra.mxu0 0
    %1270 = vmatprep.subr.bf16.mxu0 0
    %1271 = vmatpush1.bf16.msra.mxu0 0
    %1272 = vmatprep.subr.bf16.mxu0 0
    %1273 = vmatpush1.bf16.msra.mxu0 0
    %1274 = vmatprep.subr.bf16.mxu0 0
    %1275 = vmatpush1.bf16.msra.mxu0 0
    %1276 = vmatprep.subr.bf16.mxu0 0
    %1277 = vmatpush1.bf16.msra.mxu0 0
    %1278 = vmatprep.mubr.bf16.mxu0 0
    %1279 = vmatmul.mubr.bf16.gmra.mrb[0].mxu0 %v1174
    %v1280 = vpop.f32.mrb[0].mxu0
    %v1281 = vadd.f32 %v1196, %v1280
    %v1282 = vpop.f32.mrb[0].mxu0
    %v1283 = vpop.f32.mrb[0].mxu0
    %v1284 = vadd.f32 %v1196, %v1283
    %v1285 = vpop.f32.mrb[0].mxu0
    %1286 = vdwg.mxu0
    %1287 = vst [vmem:[#allocation13] sm:$0xff] %v1281
    %1288 = vst [vmem:[#allocation13 + $0x8] sm:$0xff] %v1284
    // Predicated region
    $region70: #{tpu_custom_call.1} parent=1 // pred_check
      _
    $region71: #{tpu_custom_call.1} parent=1 // pred_check_branch
      %1290 = sbr.rel (0) target = $region73
    $region72: #{tpu_custom_call.1} parent=1 // pred_region
      %s1292 = ssub.s32 256, 256
      %1293 = vsyncadd [#allocation4], %s1292
      %s1294 = sshll.u32 [#allocation13], 4
      %s1295 = int_to_ptr.vmem [resolvable:$true] %s1294
      %1300 = dma.vmem_to_hbm [thread:$0]  %s1295, 256, %s11, [#allocation4], 128, 128, 8
    $region73: #{tpu_custom_call.1} parent=1 // pred_fallthru
      _
    // Predicated region
    $region74: #{tpu_custom_call.1} parent=1 // pred_check
      _
    $region75: #{tpu_custom_call.1} parent=1 // pred_check_branch
      %1302 = sbr.rel (0) target = $region77
    $region76: #{tpu_custom_call.1} parent=1 // pred_region
      %1303 = dma.done [#allocation4], 256
    $region77: #{tpu_custom_call.1} parent=1 // pred_fallthru
      _
    %1304 = vsyncpa [#allocation3], 1
    %1305 = vsyncpa [#allocation6], 1
    %1306 = vsyncpa [#allocation9], 1
    %1307 = vsyncpa [#allocation12], 1
    %1308 = vsyncpa [#allocation4], 1

</llo_original>
